<compile_context>
chip_gen: v6e
topology: v6e:2x2x1
jax: 0.10.0
libtpu: 0.0.40
codegen_flags: <defaults>
</compile_context>

<pallas_src>
import functools

import jax
import jax.numpy as jnp
import numpy as np
from jax import lax
from jax.experimental import pallas as pl
from jax.experimental.pallas import tpu as pltpu


def _round_up(v, m):
    return (v + m - 1) // m * m


def _vgg_block_kernel(x_ref, band_ref, b_ref, o_ref, *, D, H, W, C, Co, KP, pool, eps):
    """Conv3d(3, pad=1)+bias -> InstanceNorm3d -> ReLU [-> MaxPool3d(2,2)], one sample.

    x_ref:    (1, D+2, H+2, KP)  bf16  zero-padded input; lanes = (w_pad, c), zero-padded to KP.
    band_ref: (9, KP, W*Co)      bf16  banded conv weights, one per (kd, kh); output lane =
                                       (w_out, co).  pool=True: columns ordered [even w | odd w].
    b_ref:    (1, W*Co)          f32   conv bias broadcast over the (w_out, co) lanes.
    o_ref:    (1, D//2, (H//2)*(W//2)*Co) f32 (pool)  or  (1, D, H*W*Co) f32 (no pool).
    """
    L = W * Co
    n = float(D * H * W)

    xv = x_ref[0]                                           # (D+2, H+2, KP) bf16
    acc = None
    for kd in range(3):
        for kh in range(3):
            lhs = xv[kd:kd + D, kh:kh + H, :].reshape(D * H, KP)
            part = jnp.dot(lhs, band_ref[kd * 3 + kh],
                           preferred_element_type=jnp.float32)
            acc = part if acc is None else acc + part
    acc = acc + b_ref[...]                                  # (D*H, L) f32

    # One-pass InstanceNorm statistics: per-channel (co = lane % Co) sums over (d, h, w).
    s1 = jnp.sum(acc, axis=0, keepdims=True)                # (1, L)
    s2 = jnp.sum(acc * acc, axis=0, keepdims=True)          # (1, L)
    s1c = s1[:, 0:Co]
    s2c = s2[:, 0:Co]
    for j in range(1, W):
        s1c = s1c + s1[:, j * Co:(j + 1) * Co]
        s2c = s2c + s2[:, j * Co:(j + 1) * Co]
    mean_c = s1c / n                                        # (1, Co)
    # E[x^2] - mean^2 (one-pass): slightly less cancellation-robust than two-pass; OK here.
    var_c = jnp.maximum(s2c / n - mean_c * mean_c, 0.0)
    inv_c = lax.rsqrt(var_c + eps)
    mean = jnp.concatenate([mean_c] * W, axis=-1)           # back onto the (w, co) lanes
    inv = jnp.concatenate([inv_c] * W, axis=-1)

    y = jnp.maximum((acc - mean) * inv, 0.0)                # normalize + ReLU  (D*H, L)

    if pool:
        D2, H2, W2 = D // 2, H // 2, W // 2
        Lh = W2 * Co
        m = jnp.maximum(y[:, :Lh], y[:, Lh:])               # W-pool: even | odd lane blocks
        m = m.reshape(D * H2, 2, Lh)
        m = jnp.maximum(m[:, 0], m[:, 1])                   # H-pool
        m = m.reshape(D2, 2, H2, Lh)
        m = jnp.maximum(m[:, 0], m[:, 1])                   # D-pool -> (D2, H2, Lh)
        out = jnp.concatenate([m[:, j, :] for j in range(H2)], axis=-1)   # (D2, H2*W2*Co)
    else:
        yv = y.reshape(D, H, L)
        out = jnp.concatenate([yv[:, j, :] for j in range(H)], axis=-1)   # (D, H*W*Co)
    o_ref[0] = out.astype(o_ref.dtype)


def _build_band(weight, W, C, Co, KP, pool):
    """(Co, C, 3, 3, 3) conv weights -> (9, KP, W*Co) banded matmul weights (bf16)."""
    T = np.zeros((3, W, W + 2), np.float32)
    for kw in range(3):
        for w in range(W):
            T[kw, w, w + kw] = 1.0
    # band[kd, kh, w_in, c, w_out, co] = weight[co, c, kd, kh, w_in - w_out] (0 outside band).
    band = jnp.einsum("kwv,ocdhk->dhvcwo", jnp.asarray(T), weight.astype(jnp.float32))
    band = band.reshape(3, 3, (W + 2) * C, W, Co)
    if pool:
        perm = list(range(0, W, 2)) + list(range(1, W, 2))   # output columns: [even w | odd w]
        band = band[:, :, :, perm, :]
    band = band.reshape(9, (W + 2) * C, W * Co)
    band = jnp.pad(band, ((0, 0), (0, KP - (W + 2) * C), (0, 0)))   # pad K to 128 lanes
    return band.astype(jnp.bfloat16)


@functools.partial(jax.jit, static_argnames=("stride",))
def vgg_block_3d(x, weight, bias, *, stride):
    """x: (N, C, D, H, W); weight: (Co, C, 3, 3, 3); bias: (Co,).  Returns NCDHW f32."""
    N, C, D, H, W = x.shape
    Co = weight.shape[0]
    pool = stride == 2
    if pool:
        assert D % 2 == 0 and H % 2 == 0 and W % 2 == 0
    KP = _round_up((W + 2) * C, 128)
    L = W * Co

    # Glue (plain XLA): NCDHW -> (N, D+2, H+2, KP) bf16; lanes = (w_pad, c) zero-padded to KP.
    x_l = jnp.transpose(x, (0, 2, 3, 4, 1))
    x_p = jnp.pad(x_l, ((0, 0), (1, 1), (1, 1), (1, 1), (0, 0)))
    x_p = x_p.reshape(N, D + 2, H + 2, (W + 2) * C)
    x_p = jnp.pad(x_p, ((0, 0), (0, 0), (0, 0), (0, KP - (W + 2) * C))).astype(jnp.bfloat16)

    band = _build_band(weight, W, C, Co, KP, pool)
    bias_l = jnp.tile(bias.astype(jnp.float32), W).reshape(1, L)

    if pool:
        D2, H2, W2 = D // 2, H // 2, W // 2
        out_shape = jax.ShapeDtypeStruct((N, D2, H2 * W2 * Co), jnp.float32)
        out_spec = pl.BlockSpec((1, D2, H2 * W2 * Co), lambda n_: (n_, 0, 0))
    else:
        out_shape = jax.ShapeDtypeStruct((N, D, H * W * Co), jnp.float32)
        out_spec = pl.BlockSpec((1, D, H * W * Co), lambda n_: (n_, 0, 0))

    kernel = functools.partial(_vgg_block_kernel, D=D, H=H, W=W, C=C, Co=Co, KP=KP,
                               pool=pool, eps=1e-5)
    y = pl.pallas_call(
        kernel,
        out_shape=out_shape,
        grid=(N,),
        in_specs=[
            pl.BlockSpec((1, D + 2, H + 2, KP), lambda n_: (n_, 0, 0, 0)),
            pl.BlockSpec((9, KP, L), lambda n_: (0, 0, 0)),
            pl.BlockSpec((1, L), lambda n_: (0, 0)),
        ],
        out_specs=out_spec,
        compiler_params=pltpu.CompilerParams(dimension_semantics=("parallel",)),
    )(x_p, band, bias_l)

    if pool:
        y = y.reshape(N, D // 2, H // 2, W // 2, Co)
    else:
        y = y.reshape(N, D, H, W, Co)
    return jnp.transpose(y, (0, 4, 1, 2, 3))   # back to PyTorch NCDHW


def _reference(x, weight, bias, stride):
    """Pure-JAX (f32) reference mirroring the PyTorch forward (NCDHW)."""
    y = jax.lax.conv_general_dilated(
        x, weight,
        window_strides=(1, 1, 1),
        padding=((1, 1), (1, 1), (1, 1)),
        dimension_numbers=("NCDHW", "OIDHW", "NCDHW"),
        precision=jax.lax.Precision.HIGHEST,
    )
    y = y + bias[None, :, None, None, None]
    mean = y.mean(axis=(2, 3, 4), keepdims=True)
    var = ((y - mean) ** 2).mean(axis=(2, 3, 4), keepdims=True)
    y = jnp.maximum((y - mean) / jnp.sqrt(var + 1e-5), 0.0)
    if stride == 2:
        y = jax.lax.reduce_window(
            y, -jnp.inf, jax.lax.max, (1, 1, 2, 2, 2), (1, 1, 2, 2, 2), "VALID")
    return y


if __name__ == "__main__":
    key = jax.random.PRNGKey(0)
    kx, kw, kb = jax.random.split(key, 3)

    # Small shapes consistent with VggBlock3D(C=4, C_out=8, stride=2, affine=False).
    N, C, Co, D, H, W = 2, 4, 8, 8, 8, 8

    x = jax.random.normal(kx, (N, C, D, H, W), dtype=jnp.float32)
    fan_in = C * 3 * 3 * 3
    bound = 1.0 / float(fan_in) ** 0.5
    weight = jax.random.uniform(kw, (Co, C, 3, 3, 3), jnp.float32, -bound, bound)
    bias = jax.random.uniform(kb, (Co,), jnp.float32, -bound, bound)

    # stride=2: fused conv + InstanceNorm + ReLU + MaxPool kernel.
    out = jax.block_until_ready(vgg_block_3d(x, weight, bias, stride=2))
    assert out.shape == (N, Co, D // 2, H // 2, W // 2), out.shape
    ref = _reference(x, weight, bias, 2)
    err = float(jnp.max(jnp.abs(out - ref)))
    assert err < 2e-2, f"stride=2 max abs err {err}"

    # stride=1: conv + InstanceNorm + ReLU (identity pool).
    out1 = jax.block_until_ready(vgg_block_3d(x, weight, bias, stride=1))
    assert out1.shape == (N, Co, D, H, W), out1.shape
    ref1 = _reference(x, weight, bias, 1)
    err1 = float(jnp.max(jnp.abs(out1 - ref1)))
    assert err1 < 2e-2, f"stride=1 max abs err {err1}"

    print("KERNEL_OK")
</pallas_src>

<mosaic_0001>
module attributes {stable_mosaic.version = 11 : i64} {
  func.func @_vgg_block_kernel(%arg0: i32, %arg1: memref<1x10x10x128xbf16, #tpu.memory_space<vmem>>, %arg2: memref<9x128x64xbf16, #tpu.memory_space<vmem>>, %arg3: memref<1x64xf32, #tpu.memory_space<vmem>>, %arg4: memref<1x4x128xf32, #tpu.memory_space<vmem>>) attributes {dimension_semantics = [#tpu.dimension_semantics<parallel>], iteration_bounds = array<i64: 2>, scalar_prefetch = 0 : i64, scratch_operands = 0 : i64, tpu.core_type = #tpu.core_type<tc>, window_params = [{transform_indices = @transform_0, window_bounds = array<i64: 1, 10, 10, 128>}, {pipeline_mode = #tpu.pipeline_mode<synchronous>, transform_indices = @transform_1, window_bounds = array<i64: 9, 128, 64>}, {pipeline_mode = #tpu.pipeline_mode<synchronous>, transform_indices = @transform_2, window_bounds = array<i64: 1, 64>}, {transform_indices = @transform_3, window_bounds = array<i64: 1, 4, 128>}]} {
    %c0 = arith.constant 0 : index
    %c0_0 = arith.constant 0 : index
    %c0_1 = arith.constant 0 : index
    %c0_2 = arith.constant 0 : index
    %0 = vector.load %arg1[%c0, %c0_0, %c0_1, %c0_2] : memref<1x10x10x128xbf16, #tpu.memory_space<vmem>>, vector<1x10x10x128xbf16>
    %1 = vector.shape_cast %0 : vector<1x10x10x128xbf16> to vector<10x10x128xbf16>
    %2 = vector.extract_strided_slice %1 {offsets = [0, 0, 0], sizes = [8, 8, 128], strides = [1, 1, 1]} : vector<10x10x128xbf16> to vector<8x8x128xbf16>
    %3 = vector.shape_cast %2 : vector<8x8x128xbf16> to vector<64x128xbf16>
    %c0_3 = arith.constant 0 : index
    %c0_4 = arith.constant 0 : index
    %c0_5 = arith.constant 0 : index
    %4 = vector.load %arg2[%c0_3, %c0_4, %c0_5] : memref<9x128x64xbf16, #tpu.memory_space<vmem>>, vector<1x128x64xbf16>
    %5 = vector.shape_cast %4 : vector<1x128x64xbf16> to vector<128x64xbf16>
    %cst = arith.constant dense<0.000000e+00> : vector<64x64xf32>
    %6 = tpu.matmul %3, %5, %cst {dimension_numbers = #tpu.dot_dimension_numbers<[1], [0], [0], [1], [0, 0, 1, 1], [], []>} : vector<64x128xbf16>, vector<128x64xbf16>, vector<64x64xf32> -> vector<64x64xf32>
    %7 = vector.extract_strided_slice %1 {offsets = [0, 1, 0], sizes = [8, 8, 128], strides = [1, 1, 1]} : vector<10x10x128xbf16> to vector<8x8x128xbf16>
    %8 = vector.shape_cast %7 : vector<8x8x128xbf16> to vector<64x128xbf16>
    %c1 = arith.constant 1 : index
    %c0_6 = arith.constant 0 : index
    %c0_7 = arith.constant 0 : index
    %9 = vector.load %arg2[%c1, %c0_6, %c0_7] : memref<9x128x64xbf16, #tpu.memory_space<vmem>>, vector<1x128x64xbf16>
    %10 = vector.shape_cast %9 : vector<1x128x64xbf16> to vector<128x64xbf16>
    %cst_8 = arith.constant dense<0.000000e+00> : vector<64x64xf32>
    %11 = tpu.matmul %8, %10, %cst_8 {dimension_numbers = #tpu.dot_dimension_numbers<[1], [0], [0], [1], [0, 0, 1, 1], [], []>} : vector<64x128xbf16>, vector<128x64xbf16>, vector<64x64xf32> -> vector<64x64xf32>
    %12 = arith.addf %6, %11 : vector<64x64xf32>
    %13 = vector.extract_strided_slice %1 {offsets = [0, 2, 0], sizes = [8, 8, 128], strides = [1, 1, 1]} : vector<10x10x128xbf16> to vector<8x8x128xbf16>
    %14 = vector.shape_cast %13 : vector<8x8x128xbf16> to vector<64x128xbf16>
    %c2 = arith.constant 2 : index
    %c0_9 = arith.constant 0 : index
    %c0_10 = arith.constant 0 : index
    %15 = vector.load %arg2[%c2, %c0_9, %c0_10] : memref<9x128x64xbf16, #tpu.memory_space<vmem>>, vector<1x128x64xbf16>
    %16 = vector.shape_cast %15 : vector<1x128x64xbf16> to vector<128x64xbf16>
    %cst_11 = arith.constant dense<0.000000e+00> : vector<64x64xf32>
    %17 = tpu.matmul %14, %16, %cst_11 {dimension_numbers = #tpu.dot_dimension_numbers<[1], [0], [0], [1], [0, 0, 1, 1], [], []>} : vector<64x128xbf16>, vector<128x64xbf16>, vector<64x64xf32> -> vector<64x64xf32>
    %18 = arith.addf %12, %17 : vector<64x64xf32>
    %19 = vector.extract_strided_slice %1 {offsets = [1, 0, 0], sizes = [8, 8, 128], strides = [1, 1, 1]} : vector<10x10x128xbf16> to vector<8x8x128xbf16>
    %20 = vector.shape_cast %19 : vector<8x8x128xbf16> to vector<64x128xbf16>
    %c3 = arith.constant 3 : index
    %c0_12 = arith.constant 0 : index
    %c0_13 = arith.constant 0 : index
    %21 = vector.load %arg2[%c3, %c0_12, %c0_13] : memref<9x128x64xbf16, #tpu.memory_space<vmem>>, vector<1x128x64xbf16>
    %22 = vector.shape_cast %21 : vector<1x128x64xbf16> to vector<128x64xbf16>
    %cst_14 = arith.constant dense<0.000000e+00> : vector<64x64xf32>
    %23 = tpu.matmul %20, %22, %cst_14 {dimension_numbers = #tpu.dot_dimension_numbers<[1], [0], [0], [1], [0, 0, 1, 1], [], []>} : vector<64x128xbf16>, vector<128x64xbf16>, vector<64x64xf32> -> vector<64x64xf32>
    %24 = arith.addf %18, %23 : vector<64x64xf32>
    %25 = vector.extract_strided_slice %1 {offsets = [1, 1, 0], sizes = [8, 8, 128], strides = [1, 1, 1]} : vector<10x10x128xbf16> to vector<8x8x128xbf16>
    %26 = vector.shape_cast %25 : vector<8x8x128xbf16> to vector<64x128xbf16>
    %c4 = arith.constant 4 : index
    %c0_15 = arith.constant 0 : index
    %c0_16 = arith.constant 0 : index
    %27 = vector.load %arg2[%c4, %c0_15, %c0_16] : memref<9x128x64xbf16, #tpu.memory_space<vmem>>, vector<1x128x64xbf16>
    %28 = vector.shape_cast %27 : vector<1x128x64xbf16> to vector<128x64xbf16>
    %cst_17 = arith.constant dense<0.000000e+00> : vector<64x64xf32>
    %29 = tpu.matmul %26, %28, %cst_17 {dimension_numbers = #tpu.dot_dimension_numbers<[1], [0], [0], [1], [0, 0, 1, 1], [], []>} : vector<64x128xbf16>, vector<128x64xbf16>, vector<64x64xf32> -> vector<64x64xf32>
    %30 = arith.addf %24, %29 : vector<64x64xf32>
    %31 = vector.extract_strided_slice %1 {offsets = [1, 2, 0], sizes = [8, 8, 128], strides = [1, 1, 1]} : vector<10x10x128xbf16> to vector<8x8x128xbf16>
    %32 = vector.shape_cast %31 : vector<8x8x128xbf16> to vector<64x128xbf16>
    %c5 = arith.constant 5 : index
    %c0_18 = arith.constant 0 : index
    %c0_19 = arith.constant 0 : index
    %33 = vector.load %arg2[%c5, %c0_18, %c0_19] : memref<9x128x64xbf16, #tpu.memory_space<vmem>>, vector<1x128x64xbf16>
    %34 = vector.shape_cast %33 : vector<1x128x64xbf16> to vector<128x64xbf16>
    %cst_20 = arith.constant dense<0.000000e+00> : vector<64x64xf32>
    %35 = tpu.matmul %32, %34, %cst_20 {dimension_numbers = #tpu.dot_dimension_numbers<[1], [0], [0], [1], [0, 0, 1, 1], [], []>} : vector<64x128xbf16>, vector<128x64xbf16>, vector<64x64xf32> -> vector<64x64xf32>
    %36 = arith.addf %30, %35 : vector<64x64xf32>
    %37 = vector.extract_strided_slice %1 {offsets = [2, 0, 0], sizes = [8, 8, 128], strides = [1, 1, 1]} : vector<10x10x128xbf16> to vector<8x8x128xbf16>
    %38 = vector.shape_cast %37 : vector<8x8x128xbf16> to vector<64x128xbf16>
    %c6 = arith.constant 6 : index
    %c0_21 = arith.constant 0 : index
    %c0_22 = arith.constant 0 : index
    %39 = vector.load %arg2[%c6, %c0_21, %c0_22] : memref<9x128x64xbf16, #tpu.memory_space<vmem>>, vector<1x128x64xbf16>
    %40 = vector.shape_cast %39 : vector<1x128x64xbf16> to vector<128x64xbf16>
    %cst_23 = arith.constant dense<0.000000e+00> : vector<64x64xf32>
    %41 = tpu.matmul %38, %40, %cst_23 {dimension_numbers = #tpu.dot_dimension_numbers<[1], [0], [0], [1], [0, 0, 1, 1], [], []>} : vector<64x128xbf16>, vector<128x64xbf16>, vector<64x64xf32> -> vector<64x64xf32>
    %42 = arith.addf %36, %41 : vector<64x64xf32>
    %43 = vector.extract_strided_slice %1 {offsets = [2, 1, 0], sizes = [8, 8, 128], strides = [1, 1, 1]} : vector<10x10x128xbf16> to vector<8x8x128xbf16>
    %44 = vector.shape_cast %43 : vector<8x8x128xbf16> to vector<64x128xbf16>
    %c7 = arith.constant 7 : index
    %c0_24 = arith.constant 0 : index
    %c0_25 = arith.constant 0 : index
    %45 = vector.load %arg2[%c7, %c0_24, %c0_25] : memref<9x128x64xbf16, #tpu.memory_space<vmem>>, vector<1x128x64xbf16>
    %46 = vector.shape_cast %45 : vector<1x128x64xbf16> to vector<128x64xbf16>
    %cst_26 = arith.constant dense<0.000000e+00> : vector<64x64xf32>
    %47 = tpu.matmul %44, %46, %cst_26 {dimension_numbers = #tpu.dot_dimension_numbers<[1], [0], [0], [1], [0, 0, 1, 1], [], []>} : vector<64x128xbf16>, vector<128x64xbf16>, vector<64x64xf32> -> vector<64x64xf32>
    %48 = arith.addf %42, %47 : vector<64x64xf32>
    %49 = vector.extract_strided_slice %1 {offsets = [2, 2, 0], sizes = [8, 8, 128], strides = [1, 1, 1]} : vector<10x10x128xbf16> to vector<8x8x128xbf16>
    %50 = vector.shape_cast %49 : vector<8x8x128xbf16> to vector<64x128xbf16>
    %c8 = arith.constant 8 : index
    %c0_27 = arith.constant 0 : index
    %c0_28 = arith.constant 0 : index
    %51 = vector.load %arg2[%c8, %c0_27, %c0_28] : memref<9x128x64xbf16, #tpu.memory_space<vmem>>, vector<1x128x64xbf16>
    %52 = vector.shape_cast %51 : vector<1x128x64xbf16> to vector<128x64xbf16>
    %cst_29 = arith.constant dense<0.000000e+00> : vector<64x64xf32>
    %53 = tpu.matmul %50, %52, %cst_29 {dimension_numbers = #tpu.dot_dimension_numbers<[1], [0], [0], [1], [0, 0, 1, 1], [], []>} : vector<64x128xbf16>, vector<128x64xbf16>, vector<64x64xf32> -> vector<64x64xf32>
    %54 = arith.addf %48, %53 : vector<64x64xf32>
    %c0_30 = arith.constant 0 : index
    %c0_31 = arith.constant 0 : index
    %55 = vector.load %arg3[%c0_30, %c0_31] : memref<1x64xf32, #tpu.memory_space<vmem>>, vector<1x64xf32>
    %56 = vector.broadcast %55 : vector<1x64xf32> to vector<64x64xf32>
    %57 = arith.addf %54, %56 : vector<64x64xf32>
    %cst_32 = arith.constant dense<0.000000e+00> : vector<64xf32>
    %58 = vector.multi_reduction <add>, %57, %cst_32 [0] : vector<64x64xf32> to vector<64xf32>
    %59 = vector.shape_cast %58 : vector<64xf32> to vector<1x64xf32>
    %60 = arith.mulf %57, %57 : vector<64x64xf32>
    %cst_33 = arith.constant dense<0.000000e+00> : vector<64xf32>
    %61 = vector.multi_reduction <add>, %60, %cst_33 [0] : vector<64x64xf32> to vector<64xf32>
    %62 = vector.shape_cast %61 : vector<64xf32> to vector<1x64xf32>
    %63 = vector.extract_strided_slice %59 {offsets = [0, 0], sizes = [1, 8], strides = [1, 1]} : vector<1x64xf32> to vector<1x8xf32>
    %64 = vector.extract_strided_slice %62 {offsets = [0, 0], sizes = [1, 8], strides = [1, 1]} : vector<1x64xf32> to vector<1x8xf32>
    %65 = vector.extract_strided_slice %59 {offsets = [0, 8], sizes = [1, 8], strides = [1, 1]} : vector<1x64xf32> to vector<1x8xf32>
    %66 = arith.addf %63, %65 : vector<1x8xf32>
    %67 = vector.extract_strided_slice %62 {offsets = [0, 8], sizes = [1, 8], strides = [1, 1]} : vector<1x64xf32> to vector<1x8xf32>
    %68 = arith.addf %64, %67 : vector<1x8xf32>
    %69 = vector.extract_strided_slice %59 {offsets = [0, 16], sizes = [1, 8], strides = [1, 1]} : vector<1x64xf32> to vector<1x8xf32>
    %70 = arith.addf %66, %69 : vector<1x8xf32>
    %71 = vector.extract_strided_slice %62 {offsets = [0, 16], sizes = [1, 8], strides = [1, 1]} : vector<1x64xf32> to vector<1x8xf32>
    %72 = arith.addf %68, %71 : vector<1x8xf32>
    %73 = vector.extract_strided_slice %59 {offsets = [0, 24], sizes = [1, 8], strides = [1, 1]} : vector<1x64xf32> to vector<1x8xf32>
    %74 = arith.addf %70, %73 : vector<1x8xf32>
    %75 = vector.extract_strided_slice %62 {offsets = [0, 24], sizes = [1, 8], strides = [1, 1]} : vector<1x64xf32> to vector<1x8xf32>
    %76 = arith.addf %72, %75 : vector<1x8xf32>
    %77 = vector.extract_strided_slice %59 {offsets = [0, 32], sizes = [1, 8], strides = [1, 1]} : vector<1x64xf32> to vector<1x8xf32>
    %78 = arith.addf %74, %77 : vector<1x8xf32>
    %79 = vector.extract_strided_slice %62 {offsets = [0, 32], sizes = [1, 8], strides = [1, 1]} : vector<1x64xf32> to vector<1x8xf32>
    %80 = arith.addf %76, %79 : vector<1x8xf32>
    %81 = vector.extract_strided_slice %59 {offsets = [0, 40], sizes = [1, 8], strides = [1, 1]} : vector<1x64xf32> to vector<1x8xf32>
    %82 = arith.addf %78, %81 : vector<1x8xf32>
    %83 = vector.extract_strided_slice %62 {offsets = [0, 40], sizes = [1, 8], strides = [1, 1]} : vector<1x64xf32> to vector<1x8xf32>
    %84 = arith.addf %80, %83 : vector<1x8xf32>
    %85 = vector.extract_strided_slice %59 {offsets = [0, 48], sizes = [1, 8], strides = [1, 1]} : vector<1x64xf32> to vector<1x8xf32>
    %86 = arith.addf %82, %85 : vector<1x8xf32>
    %87 = vector.extract_strided_slice %62 {offsets = [0, 48], sizes = [1, 8], strides = [1, 1]} : vector<1x64xf32> to vector<1x8xf32>
    %88 = arith.addf %84, %87 : vector<1x8xf32>
    %89 = vector.extract_strided_slice %59 {offsets = [0, 56], sizes = [1, 8], strides = [1, 1]} : vector<1x64xf32> to vector<1x8xf32>
    %90 = arith.addf %86, %89 : vector<1x8xf32>
    %91 = vector.extract_strided_slice %62 {offsets = [0, 56], sizes = [1, 8], strides = [1, 1]} : vector<1x64xf32> to vector<1x8xf32>
    %92 = arith.addf %88, %91 : vector<1x8xf32>
    %cst_34 = arith.constant 5.120000e+02 : f32
    %93 = vector.broadcast %cst_34 : f32 to vector<1x8xf32>
    %94 = arith.divf %90, %93 : vector<1x8xf32>
    %cst_35 = arith.constant 5.120000e+02 : f32
    %95 = vector.broadcast %cst_35 : f32 to vector<1x8xf32>
    %96 = arith.divf %92, %95 : vector<1x8xf32>
    %97 = arith.mulf %94, %94 : vector<1x8xf32>
    %98 = arith.subf %96, %97 : vector<1x8xf32>
    %cst_36 = arith.constant 0.000000e+00 : f32
    %99 = vector.broadcast %cst_36 : f32 to vector<1x8xf32>
    %100 = arith.maximumf %98, %99 : vector<1x8xf32>
    %cst_37 = arith.constant 9.99999974E-6 : f32
    %101 = vector.broadcast %cst_37 : f32 to vector<1x8xf32>
    %102 = arith.addf %100, %101 : vector<1x8xf32>
    %103 = math.rsqrt %102 : vector<1x8xf32>
    %104 = tpu.concatenate %94, %94, %94, %94, %94, %94, %94, %94 in 1 : vector<1x8xf32>, vector<1x8xf32>, vector<1x8xf32>, vector<1x8xf32>, vector<1x8xf32>, vector<1x8xf32>, vector<1x8xf32>, vector<1x8xf32> -> vector<1x64xf32>
    %105 = tpu.concatenate %103, %103, %103, %103, %103, %103, %103, %103 in 1 : vector<1x8xf32>, vector<1x8xf32>, vector<1x8xf32>, vector<1x8xf32>, vector<1x8xf32>, vector<1x8xf32>, vector<1x8xf32>, vector<1x8xf32> -> vector<1x64xf32>
    %106 = vector.broadcast %104 : vector<1x64xf32> to vector<64x64xf32>
    %107 = arith.subf %57, %106 : vector<64x64xf32>
    %108 = vector.broadcast %105 : vector<1x64xf32> to vector<64x64xf32>
    %109 = arith.mulf %107, %108 : vector<64x64xf32>
    %cst_38 = arith.constant 0.000000e+00 : f32
    %110 = vector.broadcast %cst_38 : f32 to vector<64x64xf32>
    %111 = arith.maximumf %109, %110 : vector<64x64xf32>
    %112 = vector.extract_strided_slice %111 {offsets = [0, 0], sizes = [64, 32], strides = [1, 1]} : vector<64x64xf32> to vector<64x32xf32>
    %113 = vector.extract_strided_slice %111 {offsets = [0, 32], sizes = [64, 32], strides = [1, 1]} : vector<64x64xf32> to vector<64x32xf32>
    %114 = arith.maximumf %112, %113 : vector<64x32xf32>
    %115 = vector.shape_cast %114 : vector<64x32xf32> to vector<32x2x32xf32>
    %116 = vector.extract_strided_slice %115 {offsets = [0, 0, 0], sizes = [32, 1, 32], strides = [1, 1, 1]} : vector<32x2x32xf32> to vector<32x1x32xf32>
    %117 = vector.shape_cast %116 : vector<32x1x32xf32> to vector<32x32xf32>
    %118 = vector.extract_strided_slice %115 {offsets = [0, 1, 0], sizes = [32, 1, 32], strides = [1, 1, 1]} : vector<32x2x32xf32> to vector<32x1x32xf32>
    %119 = vector.shape_cast %118 : vector<32x1x32xf32> to vector<32x32xf32>
    %120 = arith.maximumf %117, %119 : vector<32x32xf32>
    %121 = vector.shape_cast %120 : vector<32x32xf32> to vector<4x2x4x32xf32>
    %122 = vector.extract_strided_slice %121 {offsets = [0, 0, 0, 0], sizes = [4, 1, 4, 32], strides = [1, 1, 1, 1]} : vector<4x2x4x32xf32> to vector<4x1x4x32xf32>
    %123 = vector.shape_cast %122 : vector<4x1x4x32xf32> to vector<4x4x32xf32>
    %124 = vector.extract_strided_slice %121 {offsets = [0, 1, 0, 0], sizes = [4, 1, 4, 32], strides = [1, 1, 1, 1]} : vector<4x2x4x32xf32> to vector<4x1x4x32xf32>
    %125 = vector.shape_cast %124 : vector<4x1x4x32xf32> to vector<4x4x32xf32>
    %126 = arith.maximumf %123, %125 : vector<4x4x32xf32>
    %127 = vector.extract_strided_slice %126 {offsets = [0, 0, 0], sizes = [4, 1, 32], strides = [1, 1, 1]} : vector<4x4x32xf32> to vector<4x1x32xf32>
    %128 = vector.shape_cast %127 : vector<4x1x32xf32> to vector<4x32xf32>
    %129 = vector.extract_strided_slice %126 {offsets = [0, 1, 0], sizes = [4, 1, 32], strides = [1, 1, 1]} : vector<4x4x32xf32> to vector<4x1x32xf32>
    %130 = vector.shape_cast %129 : vector<4x1x32xf32> to vector<4x32xf32>
    %131 = vector.extract_strided_slice %126 {offsets = [0, 2, 0], sizes = [4, 1, 32], strides = [1, 1, 1]} : vector<4x4x32xf32> to vector<4x1x32xf32>
    %132 = vector.shape_cast %131 : vector<4x1x32xf32> to vector<4x32xf32>
    %133 = vector.extract_strided_slice %126 {offsets = [0, 3, 0], sizes = [4, 1, 32], strides = [1, 1, 1]} : vector<4x4x32xf32> to vector<4x1x32xf32>
    %134 = vector.shape_cast %133 : vector<4x1x32xf32> to vector<4x32xf32>
    %135 = tpu.concatenate %128, %130, %132, %134 in 1 : vector<4x32xf32>, vector<4x32xf32>, vector<4x32xf32>, vector<4x32xf32> -> vector<4x128xf32>
    %c0_39 = arith.constant 0 : index
    %c0_40 = arith.constant 0 : index
    %c0_41 = arith.constant 0 : index
    %136 = vector.load %arg4[%c0_39, %c0_40, %c0_41] : memref<1x4x128xf32, #tpu.memory_space<vmem>>, vector<1x4x128xf32>
    %137 = vector.shape_cast %136 : vector<1x4x128xf32> to vector<4x128xf32>
    %138 = vector.shape_cast %135 : vector<4x128xf32> to vector<1x4x128xf32>
    tpu.vector_store %arg4[%c0_39, %c0_40, %c0_41], %138 {strides = array<i32>} : memref<1x4x128xf32, #tpu.memory_space<vmem>>, vector<1x4x128xf32>,
    return
  }
  func.func @transform_0(%arg0: i32) -> (i32, i32, i32, i32) {
    %c0_i32 = arith.constant 0 : i32
    %c0_i32_0 = arith.constant 0 : i32
    %c0_i32_1 = arith.constant 0 : i32
    %c0_i32_2 = arith.constant 0 : i32
    return %arg0, %c0_i32, %c0_i32_0, %c0_i32_1 : i32, i32, i32, i32
  }
  func.func @transform_1(%arg0: i32) -> (i32, i32, i32) {
    %c0_i32 = arith.constant 0 : i32
    %c0_i32_0 = arith.constant 0 : i32
    %c0_i32_1 = arith.constant 0 : i32
    %c0_i32_2 = arith.constant 0 : i32
    return %c0_i32, %c0_i32_0, %c0_i32_1 : i32, i32, i32
  }
  func.func @transform_2(%arg0: i32) -> (i32, i32) {
    %c0_i32 = arith.constant 0 : i32
    %c0_i32_0 = arith.constant 0 : i32
    %c0_i32_1 = arith.constant 0 : i32
    return %c0_i32, %c0_i32_0 : i32, i32
  }
  func.func @transform_3(%arg0: i32) -> (i32, i32, i32) {
    %c0_i32 = arith.constant 0 : i32
    %c0_i32_0 = arith.constant 0 : i32
    %c0_i32_1 = arith.constant 0 : i32
    return %arg0, %c0_i32, %c0_i32_0 : i32, i32, i32
  }
}

</mosaic_0001>

<llo_original>
// kernel: tile.8
$region0: #{tile.8}
  #allocation0 [shape = 's32[1]{0}', space=sflag, size = 0x4, scoped, tag = 'scoped memory for tile.8']
  %s0 = inlined_call_operand.vmem [shape: f32[8], index: 0, kind: input, shape index: {}]
  %s1 = inlined_call_operand.vmem [shape: f32[8,8], index: 1, kind: output, shape index: {}]
  // Predicated region
  $region2: #{tile.8} parent=0 // pred_check
    _
  $region3: #{tile.8} parent=0 // pred_check_branch
    %3 = sbr.rel (0) target = $region5
  $region4: #{tile.8} parent=0 // pred_region
    _
  $region5: #{tile.8} parent=0 // pred_fallthru
    _
  %v4 = vld [vmem:[%s0] ss:$0 sm:$0xff]
  %5 = vst [vmem:[%s1] sm:$0xff] %v4

// kernel: tile.9
$region0: #{tile.9}
  %s0 = inlined_call_operand.vmem [shape: f32[8,8], index: 0, kind: input, shape index: {}]
  %s1 = inlined_call_operand.vmem [shape: f32[1,64], index: 1, kind: output, shape index: {}]
  $region1: #{tile.9} parent=0
    #allocation0 [shape = 'u8[4096]{0}', space=vmem, size = 0x1000, scoped, tag = 'scoped mem for output reshape']
    %v2 = vld [vmem:[%s0] sm:$0x1]
    %vm3 = vcmask 64512
    %4 = vst.msk [vmem:[#allocation0] sm:$0x1] %vm3, %v2
    %s5 = scalar_lea.vmem %s0, 7
    %v6 = vld [vmem:[%s5] sm:$0x1]
    %7 = vrot.lane.b32.xlu0 %v6, 56
    %v8 = vpop.permute.xlu0 %7
    %vm9 = vcmask 523712
    %10 = vst.msk [vmem:[#allocation0] sm:$0x1] %vm9, %v8
    %s11 = scalar_lea.vmem %s0, 6
    %v12 = vld [vmem:[%s11] sm:$0x1]
    %13 = vrot.lane.b32.xlu0 %v12, 48
    %v14 = vpop.permute.xlu0 %13
    %vm15 = vcmask 458112
    %16 = vst.msk [vmem:[#allocation0] sm:$0x1] %vm15, %v14
    %s17 = scalar_lea.vmem %s0, 5
    %v18 = vld [vmem:[%s17] sm:$0x1]
    %19 = vrot.lane.b32.xlu0 %v18, 40
    %v20 = vpop.permute.xlu0 %19
    %vm21 = vcmask 392512
    %22 = vst.msk [vmem:[#allocation0] sm:$0x1] %vm21, %v20
    %s23 = scalar_lea.vmem %s0, 4
    %v24 = vld [vmem:[%s23] sm:$0x1]
    %25 = vrot.lane.b32.xlu0 %v24, 32
    %v26 = vpop.permute.xlu0 %25
    %vm27 = vcmask 326912
    %28 = vst.msk [vmem:[#allocation0] sm:$0x1] %vm27, %v26
    %s29 = scalar_lea.vmem %s0, 3
    %v30 = vld [vmem:[%s29] sm:$0x1]
    %31 = vrot.lane.b32.xlu0 %v30, 24
    %v32 = vpop.permute.xlu0 %31
    %vm33 = vcmask 261312
    %34 = vst.msk [vmem:[#allocation0] sm:$0x1] %vm33, %v32
    %s35 = scalar_lea.vmem %s0, 2
    %v36 = vld [vmem:[%s35] sm:$0x1]
    %37 = vrot.lane.b32.xlu0 %v36, 16
    %v38 = vpop.permute.xlu0 %37
    %vm39 = vcmask 195712
    %40 = vst.msk [vmem:[#allocation0] sm:$0x1] %vm39, %v38
    %s41 = scalar_lea.vmem %s0, 1
    %v42 = vld [vmem:[%s41] sm:$0x1]
    %43 = vrot.lane.b32.xlu0 %v42, 8
    %v44 = vpop.permute.xlu0 %43
    %vm45 = vcmask 130112
    %46 = vst.msk [vmem:[#allocation0] sm:$0x1] %vm45, %v44
    %s48 = sshll.u32 1, 1
    %s49 = ssub.s32 %s48, 1
    %v51 = vld [vmem:[#allocation0] sm:%s49]
    %s52 = sshll.u32 1, 1
    %s53 = ssub.s32 %s52, 1
    %54 = vst [vmem:[%s1] sm:%s53] %v51

// kernel: vgg_block_3d.1
$region0: #{vgg_block_3d.1}
  #allocation0 [shape = 'u32[]', space=smem, size = 0x4, offset = 0x4, fixed_abs, tag = 'smem constant byte address 0x4 - core index']
  #allocation1 [shape = 'u32[144,128]{1,0:T(1,128)}', space=vmem, size = 0x12000, scoped, tag = 'internal scratch']
  %s0 = inlined_call_operand.vmem [shape: bf16[2,10,10,128], index: 0, kind: input, shape index: {}]
  %s1 = inlined_call_operand.vmem [shape: bf16[9,128,64], index: 1, kind: input, shape index: {}]
  %s2 = inlined_call_operand.vmem [shape: f32[1,64], index: 2, kind: input, shape index: {}]
  %s3 = inlined_call_operand.vmem [shape: f32[2,4,128], index: 3, kind: output, shape index: {}]
  %s4 = sld [smem:[#allocation0]]
  $region45: #{vgg_block_3d.1} parent=0
    _
  %s6 = ssub.s32 1, %s4
  %s7 = scalar_select 0, %s6, %s4
  loop: start=0, step=1, limit=4
  $region2: #{vgg_block_3d.1} parent=0 // loop_pre_header
    _
  $region3: #{vgg_block_3d.1} parent=0 // loop_header
    %s9 = sphi 0, %s13
    %p10 = scmp.ge.s32.totalorder %s9, 4
    %s19 = sphi 0, %s21
    %s22 = sphi 0, %s19
    %s23 = sphi 0, %s22
    %s39 = sphi 0, %s23
    %s43 = sphi 0, %s43
    %s45 = sphi 0, %s43
    %s46 = sphi 0, %s45
    %s60 = sphi 0, %s46
    %s64 = sphi 0, %s64
    %s66 = sphi 0, %s64
    %s67 = sphi 0, %s66
    %s81 = sphi 0, %s67
    %s87 = sphi 0, %s89
    %s90 = sphi 0, %s87
    %s91 = sphi 0, %s90
    %s107 = sphi 0, %s91
  $region4: #{vgg_block_3d.1} parent=0 // loop_header_branch
    %12 = sbr.rel (%p10) target = $region8
  $region5: #{vgg_block_3d.1} parent=0 // loop_body
    %s14 = ssub.s32 %s9, 1
    %s15 = ssub.s32 %s9, 2
    %s16 = sadd.s32 %s9, 1
    %s17 = ssub.s32 %s9, %s16
    %p18 = scmp.eq.s32.totalorder %s17, 0
    %s20 = sadd.s32 %s19, 1
    %s21 = scalar_select %p18, %s19, %s20
    %p24 = pneg %p18
    %p25 = scmp.eq.s32.totalorder %s9, 1
    %p26 = por %p24, %p25
    %p27 = scmp.ne.s32.totalorder %s19, %s22
    %p28 = scmp.eq.s32.totalorder %s9, 0
    %p29 = por %p27, %p28
    %p30 = scmp.ne.s32.totalorder %s19, %s22
    %p31 = scmp.eq.s32.totalorder %s14, 1
    %p32 = por %p30, %p31
    %p33 = scmp.ne.s32.totalorder %s22, %s23
    %p34 = scmp.eq.s32.totalorder %s14, 0
    %p35 = por %p33, %p34
    %p36 = scmp.ne.s32.totalorder %s22, %s23
    %p37 = scmp.eq.s32.totalorder %s15, 1
    %p38 = por %p36, %p37
    %p40 = scmp.ne.s32.totalorder %s23, %s39
    %p41 = scmp.eq.s32.totalorder %s15, 0
    %p42 = por %p40, %p41
    %s44 = sadd.s32 %s43, 1
    %p47 = scmp.eq.s32.totalorder %s9, 1
    %p48 = scmp.ne.s32.totalorder %s43, %s45
    %p49 = scmp.eq.s32.totalorder %s9, 0
    %p50 = por %p48, %p49
    %p51 = scmp.ne.s32.totalorder %s43, %s45
    %p52 = scmp.eq.s32.totalorder %s14, 1
    %p53 = por %p51, %p52
    %p54 = scmp.ne.s32.totalorder %s45, %s46
    %p55 = scmp.eq.s32.totalorder %s14, 0
    %p56 = por %p54, %p55
    %p57 = scmp.ne.s32.totalorder %s45, %s46
    %p58 = scmp.eq.s32.totalorder %s15, 1
    %p59 = por %p57, %p58
    %p61 = scmp.ne.s32.totalorder %s46, %s60
    %p62 = scmp.eq.s32.totalorder %s15, 0
    %p63 = por %p61, %p62
    %s65 = sadd.s32 %s64, 1
    %p68 = scmp.eq.s32.totalorder %s9, 1
    %p69 = scmp.ne.s32.totalorder %s64, %s66
    %p70 = scmp.eq.s32.totalorder %s9, 0
    %p71 = por %p69, %p70
    %p72 = scmp.ne.s32.totalorder %s64, %s66
    %p73 = scmp.eq.s32.totalorder %s14, 1
    %p74 = por %p72, %p73
    %p75 = scmp.ne.s32.totalorder %s66, %s67
    %p76 = scmp.eq.s32.totalorder %s14, 0
    %p77 = por %p75, %p76
    %p78 = scmp.ne.s32.totalorder %s66, %s67
    %p79 = scmp.eq.s32.totalorder %s15, 1
    %p80 = por %p78, %p79
    %p82 = scmp.ne.s32.totalorder %s67, %s81
    %p83 = scmp.eq.s32.totalorder %s15, 0
    %p84 = por %p82, %p83
    %s85 = ssub.s32 %s9, %s16
    %p86 = scmp.eq.s32.totalorder %s85, 0
    %s88 = sadd.s32 %s87, 1
    %s89 = scalar_select %p86, %s87, %s88
    %p92 = pneg %p86
    %p93 = scmp.eq.s32.totalorder %s9, 1
    %p94 = por %p92, %p93
    %p95 = scmp.ne.s32.totalorder %s87, %s90
    %p96 = scmp.eq.s32.totalorder %s9, 0
    %p97 = por %p95, %p96
    %p98 = scmp.ne.s32.totalorder %s87, %s90
    %p99 = scmp.eq.s32.totalorder %s14, 1
    %p100 = por %p98, %p99
    %p101 = scmp.ne.s32.totalorder %s90, %s91
    %p102 = scmp.eq.s32.totalorder %s14, 0
    %p103 = por %p101, %p102
    %p104 = scmp.ne.s32.totalorder %s90, %s91
    %p105 = scmp.eq.s32.totalorder %s15, 1
    %p106 = por %p104, %p105
    %p108 = scmp.ne.s32.totalorder %s91, %s107
    %p109 = scmp.eq.s32.totalorder %s15, 0
    %p110 = por %p108, %p109
    %p111 = scmp.le.s32.totalorder 1, %s9
    %p112 = scmp.lt.s32.totalorder %s9, 3
    %p113 = pnand %p111, %p112
    %p114 = pneg %p113
    // Predicated region
    $region9: #{vgg_block_3d.1} parent=5 // pred_check
      _
    $region10: #{vgg_block_3d.1} parent=5 // pred_check_branch
      %116 = sbr.rel (%p113) target = $region12
    $region11: #{vgg_block_3d.1} parent=5 // pred_region
      %s117 = ssub.s32 %s9, 1
      // Predicated region
      $region13: #{vgg_block_3d.1} parent=11 // pred_check
        %p118 = pneg %p56
      $region14: #{vgg_block_3d.1} parent=11 // pred_check_branch
        %120 = sbr.rel (%p118) target = $region16
      $region15: #{vgg_block_3d.1} parent=11 // pred_region
        _
      $region16: #{vgg_block_3d.1} parent=11 // pred_fallthru
        _
      // Predicated region
      $region17: #{vgg_block_3d.1} parent=11 // pred_check
        %p121 = pneg %p77
      $region18: #{vgg_block_3d.1} parent=11 // pred_check_branch
        %123 = sbr.rel (%p121) target = $region20
      $region19: #{vgg_block_3d.1} parent=11 // pred_region
        _
      $region20: #{vgg_block_3d.1} parent=11 // pred_fallthru
        _
    $region12: #{vgg_block_3d.1} parent=5 // pred_fallthru
      _
    %p124 = scmp.lt.s32.totalorder %s9, 2
    // Predicated region
    $region21: #{vgg_block_3d.1} parent=5 // pred_check
      %p125 = pneg %p124
    $region22: #{vgg_block_3d.1} parent=5 // pred_check_branch
      %127 = sbr.rel (%p125) target = $region24
    $region23: #{vgg_block_3d.1} parent=5 // pred_region
      // Predicated region
      $region25: #{vgg_block_3d.1} parent=23 // pred_check
        %p128 = pneg %p29
      $region26: #{vgg_block_3d.1} parent=23 // pred_check_branch
        %130 = sbr.rel (%p128) target = $region28
      $region27: #{vgg_block_3d.1} parent=23 // pred_region
        %p131 = scmp.lt.s32.totalorder %s9, 1
        %s132 = scalar_select %p131, %s9, 1
        %s133 = smul.addr %s132, 20
        %s134 = smul.addr %s133, 4
        %s135 = scalar_lea.vmem %s0, %s134
      $region28: #{vgg_block_3d.1} parent=23 // pred_fallthru
        _
    $region24: #{vgg_block_3d.1} parent=5 // pred_fallthru
      _
    %p136 = scmp.le.s32.totalorder 1, %s9
    %p137 = scmp.lt.s32.totalorder %s9, 3
    %p138 = pnand %p136, %p137
    %p139 = pneg %p138
    // Predicated region
    $region29: #{vgg_block_3d.1} parent=5 // pred_check
      _
    $region30: #{vgg_block_3d.1} parent=5 // pred_check_branch
      %141 = sbr.rel (%p138) target = $region32
    $region31: #{vgg_block_3d.1} parent=5 // pred_region
      %s142 = ssub.s32 %s9, 1
      %p143 = scmp.lt.s32.totalorder %s14, 1
      %s144 = scalar_select %p143, %s14, 1
      %s145 = smul.addr %s144, 20
      %s146 = smul.addr %s145, 4
      %s147 = scalar_lea.vmem %s0, %s146
      %p148 = pneg %p35
      %p149 = pneg %p32
      %p150 = pneg %p56
      %p151 = pneg %p53
      %p152 = pneg %p77
      %p153 = pneg %p74
      %p154 = pneg %p103
      %p155 = pneg %p100
      %p156 = scmp.lt.s32.totalorder %s14, 1
      %s157 = scalar_select %p156, %s14, 1
      %s158 = smul.addr %s157, 4
      %s159 = scalar_lea.vmem %s3, %s158
      %p160 = scmp.lt.s32.totalorder %s14, 1
      %s161 = scalar_select %p160, %s14, 1
      %s162 = smul.addr %s161, 20
      %s163 = smul.addr %s162, 4
      %s164 = scalar_lea.vmem %s0, %s163
      %p165 = scmp.lt.s32.totalorder %s14, 1
      %s166 = scalar_select %p165, %s14, 1
      %s167 = smul.addr %s166, 4
      %s168 = scalar_lea.vmem %s3, %s167
      %v170 = vld [vmem:[%s164] sm:$0xf]
      %v171 = vld [vmem:[%s164 + $0x4] sm:$0x1]
      %v172 = vld [vmem:[%s164 + $0x8] sm:$0xf]
      %v173 = vld [vmem:[%s164 + $0xc] sm:$0x1]
      %v174 = vld [vmem:[%s164 + $0x10] sm:$0xf]
      %v175 = vld [vmem:[%s164 + $0x14] sm:$0x1]
      %v176 = vld [vmem:[%s164 + $0x18] sm:$0xf]
      %v177 = vld [vmem:[%s164 + $0x1c] sm:$0x1]
      %v178 = vld [vmem:[%s164 + $0x20] sm:$0xf]
      %v179 = vld [vmem:[%s164 + $0x24] sm:$0x1]
      %v180 = vld [vmem:[%s164 + $0x28] sm:$0xf]
      %v181 = vld [vmem:[%s164 + $0x2c] sm:$0x1]
      %v182 = vld [vmem:[%s164 + $0x30] sm:$0xf]
      %v183 = vld [vmem:[%s164 + $0x34] sm:$0x1]
      %v184 = vld [vmem:[%s164 + $0x38] sm:$0xf]
      %v185 = vld [vmem:[%s164 + $0x3c] sm:$0x1]
      %v186 = vld [vmem:[%s164 + $0x40] sm:$0xf]
      %v187 = vld [vmem:[%s164 + $0x44] sm:$0x1]
      %v188 = vld [vmem:[%s164 + $0x48] sm:$0xf]
      %v189 = vld [vmem:[%s164 + $0x4c] sm:$0x1]
      %v190 = vld [vmem:[%s1] sm:$0xf]
      %v191 = vld [vmem:[%s1 + $0x4] sm:$0xf]
      %v192 = vld [vmem:[%s1 + $0x8] sm:$0xf]
      %v193 = vld [vmem:[%s1 + $0xc] sm:$0xf]
      %v194 = vld [vmem:[%s1 + $0x10] sm:$0xf]
      %v195 = vld [vmem:[%s1 + $0x14] sm:$0xf]
      %v196 = vld [vmem:[%s1 + $0x18] sm:$0xf]
      %v197 = vld [vmem:[%s1 + $0x1c] sm:$0xf]
      %v198 = vld [vmem:[%s1 + $0x20] sm:$0xf]
      %v199 = vld [vmem:[%s1 + $0x24] sm:$0xf]
      %v200 = vld [vmem:[%s1 + $0x28] sm:$0xf]
      %v201 = vld [vmem:[%s1 + $0x2c] sm:$0xf]
      %v202 = vld [vmem:[%s1 + $0x30] sm:$0xf]
      %v203 = vld [vmem:[%s1 + $0x34] sm:$0xf]
      %v204 = vld [vmem:[%s1 + $0x38] sm:$0xf]
      %v205 = vld [vmem:[%s1 + $0x3c] sm:$0xf]
      %vm206 = vsmask.f32 3328
      %vm207 = vsmask.f32 7440
      %vm208 = vmor %vm206, %vm207
      %v210 = vshrl.u32 %v170, 16
      %v212 = vrot.slane %v210, 4
      %v213 = vshll.u32 %v170, 16
      %v215 = vrot.slane %v213, 5
      %v216 = vor.u32 %v212, %v215
      %v217 = vrot.slane %v216, 4
      %v219 = vshll.u32 %v171, 16
      %v221 = vrot.slane %v219, 5
      %v222 = vsel %vm208, %v217, %v221
      %v224 = vshrl.u32 %v172, 16
      %v226 = vrot.slane %v224, 4
      %v227 = vshll.u32 %v172, 16
      %v229 = vrot.slane %v227, 5
      %v230 = vor.u32 %v226, %v229
      %v231 = vrot.slane %v230, 4
      %v233 = vshll.u32 %v173, 16
      %v235 = vrot.slane %v233, 5
      %v236 = vsel %vm208, %v231, %v235
      %v238 = vshrl.u32 %v174, 16
      %v240 = vrot.slane %v238, 4
      %v241 = vshll.u32 %v174, 16
      %v243 = vrot.slane %v241, 5
      %v244 = vor.u32 %v240, %v243
      %v245 = vrot.slane %v244, 4
      %v247 = vshll.u32 %v175, 16
      %v249 = vrot.slane %v247, 5
      %v250 = vsel %vm208, %v245, %v249
      %v252 = vshrl.u32 %v176, 16
      %v254 = vrot.slane %v252, 4
      %v255 = vshll.u32 %v176, 16
      %v257 = vrot.slane %v255, 5
      %v258 = vor.u32 %v254, %v257
      %v259 = vrot.slane %v258, 4
      %v261 = vshll.u32 %v177, 16
      %v263 = vrot.slane %v261, 5
      %v264 = vsel %vm208, %v259, %v263
      %v266 = vshrl.u32 %v178, 16
      %v268 = vrot.slane %v266, 4
      %v269 = vshll.u32 %v178, 16
      %v271 = vrot.slane %v269, 5
      %v272 = vor.u32 %v268, %v271
      %v273 = vrot.slane %v272, 4
      %v275 = vshll.u32 %v179, 16
      %v277 = vrot.slane %v275, 5
      %v278 = vsel %vm208, %v273, %v277
      %v280 = vshrl.u32 %v180, 16
      %v282 = vrot.slane %v280, 4
      %v283 = vshll.u32 %v180, 16
      %v285 = vrot.slane %v283, 5
      %v286 = vor.u32 %v282, %v285
      %v287 = vrot.slane %v286, 4
      %v289 = vshll.u32 %v181, 16
      %v291 = vrot.slane %v289, 5
      %v292 = vsel %vm208, %v287, %v291
      %v294 = vshrl.u32 %v182, 16
      %v296 = vrot.slane %v294, 4
      %v297 = vshll.u32 %v182, 16
      %v299 = vrot.slane %v297, 5
      %v300 = vor.u32 %v296, %v299
      %v301 = vrot.slane %v300, 4
      %v303 = vshll.u32 %v183, 16
      %v305 = vrot.slane %v303, 5
      %v306 = vsel %vm208, %v301, %v305
      %v308 = vshrl.u32 %v184, 16
      %v310 = vrot.slane %v308, 4
      %v311 = vshll.u32 %v184, 16
      %v313 = vrot.slane %v311, 5
      %v314 = vor.u32 %v310, %v313
      %v315 = vrot.slane %v314, 4
      %v317 = vshll.u32 %v185, 16
      %v319 = vrot.slane %v317, 5
      %v320 = vsel %vm208, %v315, %v319
      %s321 = scalar_lea.vmem %s1, 64
      %v322 = vld [vmem:[%s321] sm:$0xf]
      %v323 = vld [vmem:[%s321 + $0x4] sm:$0xf]
      %v324 = vld [vmem:[%s321 + $0x8] sm:$0xf]
      %v325 = vld [vmem:[%s321 + $0xc] sm:$0xf]
      %v326 = vld [vmem:[%s321 + $0x10] sm:$0xf]
      %v327 = vld [vmem:[%s321 + $0x14] sm:$0xf]
      %v328 = vld [vmem:[%s321 + $0x18] sm:$0xf]
      %v329 = vld [vmem:[%s321 + $0x1c] sm:$0xf]
      %v330 = vld [vmem:[%s321 + $0x20] sm:$0xf]
      %v331 = vld [vmem:[%s321 + $0x24] sm:$0xf]
      %v332 = vld [vmem:[%s321 + $0x28] sm:$0xf]
      %v333 = vld [vmem:[%s321 + $0x2c] sm:$0xf]
      %v334 = vld [vmem:[%s321 + $0x30] sm:$0xf]
      %v335 = vld [vmem:[%s321 + $0x34] sm:$0xf]
      %v336 = vld [vmem:[%s321 + $0x38] sm:$0xf]
      %v337 = vld [vmem:[%s321 + $0x3c] sm:$0xf]
      %v338 = vunpack.c.l.b16 %v222
      %v339 = vunpack.c.l.b16 %v236
      %v340 = vunpack.c.l.b16 %v250
      %v341 = vunpack.c.l.b16 %v264
      %v342 = vunpack.c.l.b16 %v278
      %v343 = vunpack.c.l.b16 %v292
      %v344 = vunpack.c.l.b16 %v306
      %v345 = vunpack.c.l.b16 %v320
      %v346 = vpack.c.b16 %v339, %v338
      %v347 = vpack.c.b16 %v341, %v340
      %v348 = vpack.c.b16 %v343, %v342
      %v349 = vpack.c.b16 %v345, %v344
      %v370 = vunpack.c.l.b16 %v322
      %v371 = vunpack.c.l.b16 %v323
      %v372 = vunpack.c.l.b16 %v324
      %v373 = vunpack.c.l.b16 %v325
      %v374 = vunpack.c.l.b16 %v326
      %v375 = vunpack.c.l.b16 %v327
      %v376 = vunpack.c.l.b16 %v328
      %v377 = vunpack.c.l.b16 %v329
      %v378 = vunpack.c.l.b16 %v330
      %v379 = vunpack.c.l.b16 %v331
      %v380 = vunpack.c.l.b16 %v332
      %v381 = vunpack.c.l.b16 %v333
      %v382 = vunpack.c.l.b16 %v334
      %v383 = vunpack.c.l.b16 %v335
      %v384 = vunpack.c.l.b16 %v336
      %v385 = vunpack.c.l.b16 %v337
      %v386 = vpack.c.b16 %v371, %v370
      %v387 = vpack.c.b16 %v373, %v372
      %v388 = vpack.c.b16 %v375, %v374
      %v389 = vpack.c.b16 %v377, %v376
      %v390 = vpack.c.b16 %v379, %v378
      %v391 = vpack.c.b16 %v381, %v380
      %v392 = vpack.c.b16 %v383, %v382
      %v393 = vpack.c.b16 %v385, %v384
      %402 = vmatprep.subr.bf16.mxu0 0
      %403 = vmatpush1.bf16.msra.mxu0 %v393
      %404 = vmatprep.subr.bf16.mxu0 0
      %405 = vmatpush1.bf16.msra.mxu0 %v392
      %406 = vmatprep.subr.bf16.mxu0 0
      %407 = vmatpush1.bf16.msra.mxu0 %v391
      %408 = vmatprep.subr.bf16.mxu0 0
      %409 = vmatpush1.bf16.msra.mxu0 %v390
      %410 = vmatprep.subr.bf16.mxu0 0
      %411 = vmatpush1.bf16.msra.mxu0 %v389
      %412 = vmatprep.subr.bf16.mxu0 0
      %413 = vmatpush1.bf16.msra.mxu0 %v388
      %414 = vmatprep.subr.bf16.mxu0 0
      %415 = vmatpush1.bf16.msra.mxu0 %v387
      %416 = vmatprep.subr.bf16.mxu0 0
      %417 = vmatpush1.bf16.msra.mxu0 %v386
      %418 = vmatprep.subr.bf16.mxu0 0
      %419 = vmatpush2.bf16.msra.mxu0 0
      %420 = vmatprep.subr.bf16.mxu0 0
      %421 = vmatpush2.bf16.msra.mxu0 0
      %422 = vmatprep.subr.bf16.mxu0 0
      %423 = vmatpush2.bf16.msra.mxu0 0
      %424 = vmatprep.subr.bf16.mxu0 0
      %425 = vmatpush2.bf16.msra.mxu0 0
      %426 = vmatprep.subr.bf16.mxu0 0
      %427 = vmatpush2.bf16.msra.mxu0 0
      %428 = vmatprep.subr.bf16.mxu0 0
      %429 = vmatpush2.bf16.msra.mxu0 0
      %430 = vmatprep.subr.bf16.mxu0 0
      %431 = vmatpush2.bf16.msra.mxu0 0
      %432 = vmatprep.subr.bf16.mxu0 0
      %433 = vmatpush2.bf16.msra.mxu0 0
      %434 = vmatprep.mubr.bf16.mxu0 0
      %435 = vmatmul.mubr.bf16.gmra.mxu0 %v346
      %v436 = vpop.f32.mrf.mxu0
      %v437 = vadd.f32 0.0, %v436
      %v438 = vpop.f32.mrf.mxu0
      %v439 = vpop.f32.mrf.mxu0
      %v440 = vadd.f32 0.0, %v439
      %v441 = vpop.f32.mrf.mxu0
      %442 = vmatprep.mubr.bf16.mxu0 0
      %443 = vmatmul.mubr.bf16.gmra.mxu0 %v347
      %v444 = vpop.f32.mrf.mxu0
      %v445 = vadd.f32 0.0, %v444
      %v446 = vpop.f32.mrf.mxu0
      %v447 = vpop.f32.mrf.mxu0
      %v448 = vadd.f32 0.0, %v447
      %v449 = vpop.f32.mrf.mxu0
      %450 = vmatprep.mubr.bf16.mxu0 0
      %451 = vmatmul.mubr.bf16.gmra.mxu0 %v348
      %v452 = vpop.f32.mrf.mxu0
      %v453 = vadd.f32 0.0, %v452
      %v454 = vpop.f32.mrf.mxu0
      %v455 = vpop.f32.mrf.mxu0
      %v456 = vadd.f32 0.0, %v455
      %v457 = vpop.f32.mrf.mxu0
      %458 = vmatprep.mubr.bf16.mxu0 0
      %459 = vmatmul.mubr.bf16.gmra.mxu0 %v349
      %v460 = vpop.f32.mrf.mxu0
      %v461 = vadd.f32 0.0, %v460
      %v462 = vpop.f32.mrf.mxu0
      %v463 = vpop.f32.mrf.mxu0
      %v464 = vadd.f32 0.0, %v463
      %v465 = vpop.f32.mrf.mxu0
      %466 = vdwg.mxu0
      %v475 = vunpack.c.l.b16 %v170
      %v476 = vunpack.c.l.b16 %v172
      %v477 = vunpack.c.l.b16 %v174
      %v478 = vunpack.c.l.b16 %v176
      %v479 = vunpack.c.l.b16 %v178
      %v480 = vunpack.c.l.b16 %v180
      %v481 = vunpack.c.l.b16 %v182
      %v482 = vunpack.c.l.b16 %v184
      %v483 = vpack.c.b16 %v476, %v475
      %v484 = vpack.c.b16 %v478, %v477
      %v485 = vpack.c.b16 %v480, %v479
      %v486 = vpack.c.b16 %v482, %v481
      %v507 = vunpack.c.l.b16 %v190
      %v508 = vunpack.c.l.b16 %v191
      %v509 = vunpack.c.l.b16 %v192
      %v510 = vunpack.c.l.b16 %v193
      %v511 = vunpack.c.l.b16 %v194
      %v512 = vunpack.c.l.b16 %v195
      %v513 = vunpack.c.l.b16 %v196
      %v514 = vunpack.c.l.b16 %v197
      %v515 = vunpack.c.l.b16 %v198
      %v516 = vunpack.c.l.b16 %v199
      %v517 = vunpack.c.l.b16 %v200
      %v518 = vunpack.c.l.b16 %v201
      %v519 = vunpack.c.l.b16 %v202
      %v520 = vunpack.c.l.b16 %v203
      %v521 = vunpack.c.l.b16 %v204
      %v522 = vunpack.c.l.b16 %v205
      %v523 = vpack.c.b16 %v508, %v507
      %v524 = vpack.c.b16 %v510, %v509
      %v525 = vpack.c.b16 %v512, %v511
      %v526 = vpack.c.b16 %v514, %v513
      %v527 = vpack.c.b16 %v516, %v515
      %v528 = vpack.c.b16 %v518, %v517
      %v529 = vpack.c.b16 %v520, %v519
      %v530 = vpack.c.b16 %v522, %v521
      %539 = vmatprep.subr.bf16.mxu0 0
      %540 = vmatpush1.bf16.msra.mxu0 %v530
      %541 = vmatprep.subr.bf16.mxu0 0
      %542 = vmatpush1.bf16.msra.mxu0 %v529
      %543 = vmatprep.subr.bf16.mxu0 0
      %544 = vmatpush1.bf16.msra.mxu0 %v528
      %545 = vmatprep.subr.bf16.mxu0 0
      %546 = vmatpush1.bf16.msra.mxu0 %v527
      %547 = vmatprep.subr.bf16.mxu0 0
      %548 = vmatpush1.bf16.msra.mxu0 %v526
      %549 = vmatprep.subr.bf16.mxu0 0
      %550 = vmatpush1.bf16.msra.mxu0 %v525
      %551 = vmatprep.subr.bf16.mxu0 0
      %552 = vmatpush1.bf16.msra.mxu0 %v524
      %553 = vmatprep.subr.bf16.mxu0 0
      %554 = vmatpush1.bf16.msra.mxu0 %v523
      %555 = vmatprep.subr.bf16.mxu0 0
      %556 = vmatpush2.bf16.msra.mxu0 0
      %557 = vmatprep.subr.bf16.mxu0 0
      %558 = vmatpush2.bf16.msra.mxu0 0
      %559 = vmatprep.subr.bf16.mxu0 0
      %560 = vmatpush2.bf16.msra.mxu0 0
      %561 = vmatprep.subr.bf16.mxu0 0
      %562 = vmatpush2.bf16.msra.mxu0 0
      %563 = vmatprep.subr.bf16.mxu0 0
      %564 = vmatpush2.bf16.msra.mxu0 0
      %565 = vmatprep.subr.bf16.mxu0 0
      %566 = vmatpush2.bf16.msra.mxu0 0
      %567 = vmatprep.subr.bf16.mxu0 0
      %568 = vmatpush2.bf16.msra.mxu0 0
      %569 = vmatprep.subr.bf16.mxu0 0
      %570 = vmatpush2.bf16.msra.mxu0 0
      %571 = vmatprep.mubr.bf16.mxu0 0
      %572 = vmatmul.mubr.bf16.gmra.mxu0 %v483
      %v573 = vpop.f32.mrf.mxu0
      %v574 = vadd.f32 %v437, %v573
      %v575 = vpop.f32.mrf.mxu0
      %v576 = vpop.f32.mrf.mxu0
      %v577 = vadd.f32 %v440, %v576
      %v578 = vpop.f32.mrf.mxu0
      %579 = vmatprep.mubr.bf16.mxu0 0
      %580 = vmatmul.mubr.bf16.gmra.mxu0 %v484
      %v581 = vpop.f32.mrf.mxu0
      %v582 = vadd.f32 %v445, %v581
      %v583 = vpop.f32.mrf.mxu0
      %v584 = vpop.f32.mrf.mxu0
      %v585 = vadd.f32 %v448, %v584
      %v586 = vpop.f32.mrf.mxu0
      %587 = vmatprep.mubr.bf16.mxu0 0
      %588 = vmatmul.mubr.bf16.gmra.mxu0 %v485
      %v589 = vpop.f32.mrf.mxu0
      %v590 = vadd.f32 %v453, %v589
      %v591 = vpop.f32.mrf.mxu0
      %v592 = vpop.f32.mrf.mxu0
      %v593 = vadd.f32 %v456, %v592
      %v594 = vpop.f32.mrf.mxu0
      %595 = vmatprep.mubr.bf16.mxu0 0
      %596 = vmatmul.mubr.bf16.gmra.mxu0 %v486
      %v597 = vpop.f32.mrf.mxu0
      %v598 = vadd.f32 %v461, %v597
      %v599 = vpop.f32.mrf.mxu0
      %v600 = vpop.f32.mrf.mxu0
      %v601 = vadd.f32 %v464, %v600
      %v602 = vpop.f32.mrf.mxu0
      %603 = vdwg.mxu0
      %vm612 = vcmask 1042432
      %vm613 = vcmask 1046532
      %vm614 = vmor %vm612, %vm613
      %v615 = vrot.slane %v170, 5
      %v616 = vrot.slane %v615, 4
      %v617 = vrot.slane %v171, 5
      %v618 = vsel %vm614, %v616, %v617
      %v619 = vrot.slane %v172, 5
      %v620 = vrot.slane %v619, 4
      %v621 = vrot.slane %v173, 5
      %v622 = vsel %vm614, %v620, %v621
      %v623 = vrot.slane %v174, 5
      %v624 = vrot.slane %v623, 4
      %v625 = vrot.slane %v175, 5
      %v626 = vsel %vm614, %v624, %v625
      %v627 = vrot.slane %v176, 5
      %v628 = vrot.slane %v627, 4
      %v629 = vrot.slane %v177, 5
      %v630 = vsel %vm614, %v628, %v629
      %v631 = vrot.slane %v178, 5
      %v632 = vrot.slane %v631, 4
      %v633 = vrot.slane %v179, 5
      %v634 = vsel %vm614, %v632, %v633
      %v635 = vrot.slane %v180, 5
      %v636 = vrot.slane %v635, 4
      %v637 = vrot.slane %v181, 5
      %v638 = vsel %vm614, %v636, %v637
      %v639 = vrot.slane %v182, 5
      %v640 = vrot.slane %v639, 4
      %v641 = vrot.slane %v183, 5
      %v642 = vsel %vm614, %v640, %v641
      %v643 = vrot.slane %v184, 5
      %v644 = vrot.slane %v643, 4
      %v645 = vrot.slane %v185, 5
      %v646 = vsel %vm614, %v644, %v645
      %s647 = scalar_lea.vmem %s1, 128
      %v648 = vld [vmem:[%s647] sm:$0xf]
      %v649 = vld [vmem:[%s647 + $0x4] sm:$0xf]
      %v650 = vld [vmem:[%s647 + $0x8] sm:$0xf]
      %v651 = vld [vmem:[%s647 + $0xc] sm:$0xf]
      %v652 = vld [vmem:[%s647 + $0x10] sm:$0xf]
      %v653 = vld [vmem:[%s647 + $0x14] sm:$0xf]
      %v654 = vld [vmem:[%s647 + $0x18] sm:$0xf]
      %v655 = vld [vmem:[%s647 + $0x1c] sm:$0xf]
      %v656 = vld [vmem:[%s647 + $0x20] sm:$0xf]
      %v657 = vld [vmem:[%s647 + $0x24] sm:$0xf]
      %v658 = vld [vmem:[%s647 + $0x28] sm:$0xf]
      %v659 = vld [vmem:[%s647 + $0x2c] sm:$0xf]
      %v660 = vld [vmem:[%s647 + $0x30] sm:$0xf]
      %v661 = vld [vmem:[%s647 + $0x34] sm:$0xf]
      %v662 = vld [vmem:[%s647 + $0x38] sm:$0xf]
      %v663 = vld [vmem:[%s647 + $0x3c] sm:$0xf]
      %v664 = vunpack.c.l.b16 %v618
      %v665 = vunpack.c.l.b16 %v622
      %v666 = vunpack.c.l.b16 %v626
      %v667 = vunpack.c.l.b16 %v630
      %v668 = vunpack.c.l.b16 %v634
      %v669 = vunpack.c.l.b16 %v638
      %v670 = vunpack.c.l.b16 %v642
      %v671 = vunpack.c.l.b16 %v646
      %v672 = vpack.c.b16 %v665, %v664
      %v673 = vpack.c.b16 %v667, %v666
      %v674 = vpack.c.b16 %v669, %v668
      %v675 = vpack.c.b16 %v671, %v670
      %v696 = vunpack.c.l.b16 %v648
      %v697 = vunpack.c.l.b16 %v649
      %v698 = vunpack.c.l.b16 %v650
      %v699 = vunpack.c.l.b16 %v651
      %v700 = vunpack.c.l.b16 %v652
      %v701 = vunpack.c.l.b16 %v653
      %v702 = vunpack.c.l.b16 %v654
      %v703 = vunpack.c.l.b16 %v655
      %v704 = vunpack.c.l.b16 %v656
      %v705 = vunpack.c.l.b16 %v657
      %v706 = vunpack.c.l.b16 %v658
      %v707 = vunpack.c.l.b16 %v659
      %v708 = vunpack.c.l.b16 %v660
      %v709 = vunpack.c.l.b16 %v661
      %v710 = vunpack.c.l.b16 %v662
      %v711 = vunpack.c.l.b16 %v663
      %v712 = vpack.c.b16 %v697, %v696
      %v713 = vpack.c.b16 %v699, %v698
      %v714 = vpack.c.b16 %v701, %v700
      %v715 = vpack.c.b16 %v703, %v702
      %v716 = vpack.c.b16 %v705, %v704
      %v717 = vpack.c.b16 %v707, %v706
      %v718 = vpack.c.b16 %v709, %v708
      %v719 = vpack.c.b16 %v711, %v710
      %728 = vmatprep.subr.bf16.mxu0 0
      %729 = vmatpush1.bf16.msra.mxu0 %v719
      %730 = vmatprep.subr.bf16.mxu0 0
      %731 = vmatpush1.bf16.msra.mxu0 %v718
      %732 = vmatprep.subr.bf16.mxu0 0
      %733 = vmatpush1.bf16.msra.mxu0 %v717
      %734 = vmatprep.subr.bf16.mxu0 0
      %735 = vmatpush1.bf16.msra.mxu0 %v716
      %736 = vmatprep.subr.bf16.mxu0 0
      %737 = vmatpush1.bf16.msra.mxu0 %v715
      %738 = vmatprep.subr.bf16.mxu0 0
      %739 = vmatpush1.bf16.msra.mxu0 %v714
      %740 = vmatprep.subr.bf16.mxu0 0
      %741 = vmatpush1.bf16.msra.mxu0 %v713
      %742 = vmatprep.subr.bf16.mxu0 0
      %743 = vmatpush1.bf16.msra.mxu0 %v712
      %744 = vmatprep.subr.bf16.mxu0 0
      %745 = vmatpush2.bf16.msra.mxu0 0
      %746 = vmatprep.subr.bf16.mxu0 0
      %747 = vmatpush2.bf16.msra.mxu0 0
      %748 = vmatprep.subr.bf16.mxu0 0
      %749 = vmatpush2.bf16.msra.mxu0 0
      %750 = vmatprep.subr.bf16.mxu0 0
      %751 = vmatpush2.bf16.msra.mxu0 0
      %752 = vmatprep.subr.bf16.mxu0 0
      %753 = vmatpush2.bf16.msra.mxu0 0
      %754 = vmatprep.subr.bf16.mxu0 0
      %755 = vmatpush2.bf16.msra.mxu0 0
      %756 = vmatprep.subr.bf16.mxu0 0
      %757 = vmatpush2.bf16.msra.mxu0 0
      %758 = vmatprep.subr.bf16.mxu0 0
      %759 = vmatpush2.bf16.msra.mxu0 0
      %760 = vmatprep.mubr.bf16.mxu0 0
      %761 = vmatmul.mubr.bf16.gmra.mxu0 %v672
      %v762 = vpop.f32.mrf.mxu0
      %v763 = vadd.f32 0.0, %v762
      %v764 = vpop.f32.mrf.mxu0
      %v765 = vpop.f32.mrf.mxu0
      %v766 = vadd.f32 0.0, %v765
      %v767 = vpop.f32.mrf.mxu0
      %768 = vmatprep.mubr.bf16.mxu0 0
      %769 = vmatmul.mubr.bf16.gmra.mxu0 %v673
      %v770 = vpop.f32.mrf.mxu0
      %v771 = vadd.f32 0.0, %v770
      %v772 = vpop.f32.mrf.mxu0
      %v773 = vpop.f32.mrf.mxu0
      %v774 = vadd.f32 0.0, %v773
      %v775 = vpop.f32.mrf.mxu0
      %776 = vmatprep.mubr.bf16.mxu0 0
      %777 = vmatmul.mubr.bf16.gmra.mxu0 %v674
      %v778 = vpop.f32.mrf.mxu0
      %v779 = vadd.f32 0.0, %v778
      %v780 = vpop.f32.mrf.mxu0
      %v781 = vpop.f32.mrf.mxu0
      %v782 = vadd.f32 0.0, %v781
      %v783 = vpop.f32.mrf.mxu0
      %784 = vmatprep.mubr.bf16.mxu0 0
      %785 = vmatmul.mubr.bf16.gmra.mxu0 %v675
      %v786 = vpop.f32.mrf.mxu0
      %v787 = vadd.f32 0.0, %v786
      %v788 = vpop.f32.mrf.mxu0
      %v789 = vpop.f32.mrf.mxu0
      %v790 = vadd.f32 0.0, %v789
      %v791 = vpop.f32.mrf.mxu0
      %792 = vdwg.mxu0
      %v793 = vadd.f32 %v574, %v763
      %v794 = vadd.f32 %v577, %v766
      %v795 = vadd.f32 %v582, %v771
      %v796 = vadd.f32 %v585, %v774
      %v797 = vadd.f32 %v590, %v779
      %v798 = vadd.f32 %v593, %v782
      %v799 = vadd.f32 %v598, %v787
      %v800 = vadd.f32 %v601, %v790
      %s801 = scalar_lea.vmem %s1, 192
      %v802 = vld [vmem:[%s801] sm:$0xf]
      %v803 = vld [vmem:[%s801 + $0x4] sm:$0xf]
      %v804 = vld [vmem:[%s801 + $0x8] sm:$0xf]
      %v805 = vld [vmem:[%s801 + $0xc] sm:$0xf]
      %v806 = vld [vmem:[%s801 + $0x10] sm:$0xf]
      %v807 = vld [vmem:[%s801 + $0x14] sm:$0xf]
      %v808 = vld [vmem:[%s801 + $0x18] sm:$0xf]
      %v809 = vld [vmem:[%s801 + $0x1c] sm:$0xf]
      %v810 = vld [vmem:[%s801 + $0x20] sm:$0xf]
      %v811 = vld [vmem:[%s801 + $0x24] sm:$0xf]
      %v812 = vld [vmem:[%s801 + $0x28] sm:$0xf]
      %v813 = vld [vmem:[%s801 + $0x2c] sm:$0xf]
      %v814 = vld [vmem:[%s801 + $0x30] sm:$0xf]
      %v815 = vld [vmem:[%s801 + $0x34] sm:$0xf]
      %v816 = vld [vmem:[%s801 + $0x38] sm:$0xf]
      %v817 = vld [vmem:[%s801 + $0x3c] sm:$0xf]
      %v819 = vunpack.c.l.b16 %v186
      %v820 = vpack.c.b16 %v477, %v476
      %v821 = vpack.c.b16 %v479, %v478
      %v822 = vpack.c.b16 %v481, %v480
      %v823 = vpack.c.b16 %v819, %v482
      %v844 = vunpack.c.l.b16 %v802
      %v845 = vunpack.c.l.b16 %v803
      %v846 = vunpack.c.l.b16 %v804
      %v847 = vunpack.c.l.b16 %v805
      %v848 = vunpack.c.l.b16 %v806
      %v849 = vunpack.c.l.b16 %v807
      %v850 = vunpack.c.l.b16 %v808
      %v851 = vunpack.c.l.b16 %v809
      %v852 = vunpack.c.l.b16 %v810
      %v853 = vunpack.c.l.b16 %v811
      %v854 = vunpack.c.l.b16 %v812
      %v855 = vunpack.c.l.b16 %v813
      %v856 = vunpack.c.l.b16 %v814
      %v857 = vunpack.c.l.b16 %v815
      %v858 = vunpack.c.l.b16 %v816
      %v859 = vunpack.c.l.b16 %v817
      %v860 = vpack.c.b16 %v845, %v844
      %v861 = vpack.c.b16 %v847, %v846
      %v862 = vpack.c.b16 %v849, %v848
      %v863 = vpack.c.b16 %v851, %v850
      %v864 = vpack.c.b16 %v853, %v852
      %v865 = vpack.c.b16 %v855, %v854
      %v866 = vpack.c.b16 %v857, %v856
      %v867 = vpack.c.b16 %v859, %v858
      %876 = vmatprep.subr.bf16.mxu0 0
      %877 = vmatpush1.bf16.msra.mxu0 %v867
      %878 = vmatprep.subr.bf16.mxu0 0
      %879 = vmatpush1.bf16.msra.mxu0 %v866
      %880 = vmatprep.subr.bf16.mxu0 0
      %881 = vmatpush1.bf16.msra.mxu0 %v865
      %882 = vmatprep.subr.bf16.mxu0 0
      %883 = vmatpush1.bf16.msra.mxu0 %v864
      %884 = vmatprep.subr.bf16.mxu0 0
      %885 = vmatpush1.bf16.msra.mxu0 %v863
      %886 = vmatprep.subr.bf16.mxu0 0
      %887 = vmatpush1.bf16.msra.mxu0 %v862
      %888 = vmatprep.subr.bf16.mxu0 0
      %889 = vmatpush1.bf16.msra.mxu0 %v861
      %890 = vmatprep.subr.bf16.mxu0 0
      %891 = vmatpush1.bf16.msra.mxu0 %v860
      %892 = vmatprep.subr.bf16.mxu0 0
      %893 = vmatpush2.bf16.msra.mxu0 0
      %894 = vmatprep.subr.bf16.mxu0 0
      %895 = vmatpush2.bf16.msra.mxu0 0
      %896 = vmatprep.subr.bf16.mxu0 0
      %897 = vmatpush2.bf16.msra.mxu0 0
      %898 = vmatprep.subr.bf16.mxu0 0
      %899 = vmatpush2.bf16.msra.mxu0 0
      %900 = vmatprep.subr.bf16.mxu0 0
      %901 = vmatpush2.bf16.msra.mxu0 0
      %902 = vmatprep.subr.bf16.mxu0 0
      %903 = vmatpush2.bf16.msra.mxu0 0
      %904 = vmatprep.subr.bf16.mxu0 0
      %905 = vmatpush2.bf16.msra.mxu0 0
      %906 = vmatprep.subr.bf16.mxu0 0
      %907 = vmatpush2.bf16.msra.mxu0 0
      %908 = vmatprep.mubr.bf16.mxu0 0
      %909 = vmatmul.mubr.bf16.gmra.mxu0 %v820
      %v910 = vpop.f32.mrf.mxu0
      %v911 = vadd.f32 0.0, %v910
      %v912 = vpop.f32.mrf.mxu0
      %v913 = vpop.f32.mrf.mxu0
      %v914 = vadd.f32 0.0, %v913
      %v915 = vpop.f32.mrf.mxu0
      %916 = vmatprep.mubr.bf16.mxu0 0
      %917 = vmatmul.mubr.bf16.gmra.mxu0 %v821
      %v918 = vpop.f32.mrf.mxu0
      %v919 = vadd.f32 0.0, %v918
      %v920 = vpop.f32.mrf.mxu0
      %v921 = vpop.f32.mrf.mxu0
      %v922 = vadd.f32 0.0, %v921
      %v923 = vpop.f32.mrf.mxu0
      %924 = vmatprep.mubr.bf16.mxu0 0
      %925 = vmatmul.mubr.bf16.gmra.mxu0 %v822
      %v926 = vpop.f32.mrf.mxu0
      %v927 = vadd.f32 0.0, %v926
      %v928 = vpop.f32.mrf.mxu0
      %v929 = vpop.f32.mrf.mxu0
      %v930 = vadd.f32 0.0, %v929
      %v931 = vpop.f32.mrf.mxu0
      %932 = vmatprep.mubr.bf16.mxu0 0
      %933 = vmatmul.mubr.bf16.gmra.mxu0 %v823
      %v934 = vpop.f32.mrf.mxu0
      %v935 = vadd.f32 0.0, %v934
      %v936 = vpop.f32.mrf.mxu0
      %v937 = vpop.f32.mrf.mxu0
      %v938 = vadd.f32 0.0, %v937
      %v939 = vpop.f32.mrf.mxu0
      %940 = vdwg.mxu0
      %v941 = vadd.f32 %v793, %v911
      %v942 = vadd.f32 %v794, %v914
      %v943 = vadd.f32 %v795, %v919
      %v944 = vadd.f32 %v796, %v922
      %v945 = vadd.f32 %v797, %v927
      %v946 = vadd.f32 %v798, %v930
      %v947 = vadd.f32 %v799, %v935
      %v948 = vadd.f32 %v800, %v938
      %v950 = vshrl.u32 %v186, 16
      %v952 = vrot.slane %v950, 4
      %v953 = vshll.u32 %v186, 16
      %v955 = vrot.slane %v953, 5
      %v956 = vor.u32 %v952, %v955
      %v957 = vrot.slane %v956, 4
      %v959 = vshll.u32 %v187, 16
      %v961 = vrot.slane %v959, 5
      %v962 = vsel %vm208, %v957, %v961
      %s963 = scalar_lea.vmem %s1, 256
      %v964 = vld [vmem:[%s963] sm:$0xf]
      %v965 = vld [vmem:[%s963 + $0x4] sm:$0xf]
      %v966 = vld [vmem:[%s963 + $0x8] sm:$0xf]
      %v967 = vld [vmem:[%s963 + $0xc] sm:$0xf]
      %v968 = vld [vmem:[%s963 + $0x10] sm:$0xf]
      %v969 = vld [vmem:[%s963 + $0x14] sm:$0xf]
      %v970 = vld [vmem:[%s963 + $0x18] sm:$0xf]
      %v971 = vld [vmem:[%s963 + $0x1c] sm:$0xf]
      %v972 = vld [vmem:[%s963 + $0x20] sm:$0xf]
      %v973 = vld [vmem:[%s963 + $0x24] sm:$0xf]
      %v974 = vld [vmem:[%s963 + $0x28] sm:$0xf]
      %v975 = vld [vmem:[%s963 + $0x2c] sm:$0xf]
      %v976 = vld [vmem:[%s963 + $0x30] sm:$0xf]
      %v977 = vld [vmem:[%s963 + $0x34] sm:$0xf]
      %v978 = vld [vmem:[%s963 + $0x38] sm:$0xf]
      %v979 = vld [vmem:[%s963 + $0x3c] sm:$0xf]
      %v980 = vunpack.c.l.b16 %v962
      %v981 = vpack.c.b16 %v340, %v339
      %v982 = vpack.c.b16 %v342, %v341
      %v983 = vpack.c.b16 %v344, %v343
      %v984 = vpack.c.b16 %v980, %v345
      %v1005 = vunpack.c.l.b16 %v964
      %v1006 = vunpack.c.l.b16 %v965
      %v1007 = vunpack.c.l.b16 %v966
      %v1008 = vunpack.c.l.b16 %v967
      %v1009 = vunpack.c.l.b16 %v968
      %v1010 = vunpack.c.l.b16 %v969
      %v1011 = vunpack.c.l.b16 %v970
      %v1012 = vunpack.c.l.b16 %v971
      %v1013 = vunpack.c.l.b16 %v972
      %v1014 = vunpack.c.l.b16 %v973
      %v1015 = vunpack.c.l.b16 %v974
      %v1016 = vunpack.c.l.b16 %v975
      %v1017 = vunpack.c.l.b16 %v976
      %v1018 = vunpack.c.l.b16 %v977
      %v1019 = vunpack.c.l.b16 %v978
      %v1020 = vunpack.c.l.b16 %v979
      %v1021 = vpack.c.b16 %v1006, %v1005
      %v1022 = vpack.c.b16 %v1008, %v1007
      %v1023 = vpack.c.b16 %v1010, %v1009
      %v1024 = vpack.c.b16 %v1012, %v1011
      %v1025 = vpack.c.b16 %v1014, %v1013
      %v1026 = vpack.c.b16 %v1016, %v1015
      %v1027 = vpack.c.b16 %v1018, %v1017
      %v1028 = vpack.c.b16 %v1020, %v1019
      %1037 = vmatprep.subr.bf16.mxu0 0
      %1038 = vmatpush1.bf16.msra.mxu0 %v1028
      %1039 = vmatprep.subr.bf16.mxu0 0
      %1040 = vmatpush1.bf16.msra.mxu0 %v1027
      %1041 = vmatprep.subr.bf16.mxu0 0
      %1042 = vmatpush1.bf16.msra.mxu0 %v1026
      %1043 = vmatprep.subr.bf16.mxu0 0
      %1044 = vmatpush1.bf16.msra.mxu0 %v1025
      %1045 = vmatprep.subr.bf16.mxu0 0
      %1046 = vmatpush1.bf16.msra.mxu0 %v1024
      %1047 = vmatprep.subr.bf16.mxu0 0
      %1048 = vmatpush1.bf16.msra.mxu0 %v1023
      %1049 = vmatprep.subr.bf16.mxu0 0
      %1050 = vmatpush1.bf16.msra.mxu0 %v1022
      %1051 = vmatprep.subr.bf16.mxu0 0
      %1052 = vmatpush1.bf16.msra.mxu0 %v1021
      %1053 = vmatprep.subr.bf16.mxu0 0
      %1054 = vmatpush2.bf16.msra.mxu0 0
      %1055 = vmatprep.subr.bf16.mxu0 0
      %1056 = vmatpush2.bf16.msra.mxu0 0
      %1057 = vmatprep.subr.bf16.mxu0 0
      %1058 = vmatpush2.bf16.msra.mxu0 0
      %1059 = vmatprep.subr.bf16.mxu0 0
      %1060 = vmatpush2.bf16.msra.mxu0 0
      %1061 = vmatprep.subr.bf16.mxu0 0
      %1062 = vmatpush2.bf16.msra.mxu0 0
      %1063 = vmatprep.subr.bf16.mxu0 0
      %1064 = vmatpush2.bf16.msra.mxu0 0
      %1065 = vmatprep.subr.bf16.mxu0 0
      %1066 = vmatpush2.bf16.msra.mxu0 0
      %1067 = vmatprep.subr.bf16.mxu0 0
      %1068 = vmatpush2.bf16.msra.mxu0 0
      %1069 = vmatprep.mubr.bf16.mxu0 0
      %1070 = vmatmul.mubr.bf16.gmra.mxu0 %v981
      %v1071 = vpop.f32.mrf.mxu0
      %v1072 = vadd.f32 0.0, %v1071
      %v1073 = vpop.f32.mrf.mxu0
      %v1074 = vpop.f32.mrf.mxu0
      %v1075 = vadd.f32 0.0, %v1074
      %v1076 = vpop.f32.mrf.mxu0
      %1077 = vmatprep.mubr.bf16.mxu0 0
      %1078 = vmatmul.mubr.bf16.gmra.mxu0 %v982
      %v1079 = vpop.f32.mrf.mxu0
      %v1080 = vadd.f32 0.0, %v1079
      %v1081 = vpop.f32.mrf.mxu0
      %v1082 = vpop.f32.mrf.mxu0
      %v1083 = vadd.f32 0.0, %v1082
      %v1084 = vpop.f32.mrf.mxu0
      %1085 = vmatprep.mubr.bf16.mxu0 0
      %1086 = vmatmul.mubr.bf16.gmra.mxu0 %v983
      %v1087 = vpop.f32.mrf.mxu0
      %v1088 = vadd.f32 0.0, %v1087
      %v1089 = vpop.f32.mrf.mxu0
      %v1090 = vpop.f32.mrf.mxu0
      %v1091 = vadd.f32 0.0, %v1090
      %v1092 = vpop.f32.mrf.mxu0
      %1093 = vmatprep.mubr.bf16.mxu0 0
      %1094 = vmatmul.mubr.bf16.gmra.mxu0 %v984
      %v1095 = vpop.f32.mrf.mxu0
      %v1096 = vadd.f32 0.0, %v1095
      %v1097 = vpop.f32.mrf.mxu0
      %v1098 = vpop.f32.mrf.mxu0
      %v1099 = vadd.f32 0.0, %v1098
      %v1100 = vpop.f32.mrf.mxu0
      %1101 = vdwg.mxu0
      %v1102 = vadd.f32 %v941, %v1072
      %v1103 = vadd.f32 %v942, %v1075
      %v1104 = vadd.f32 %v943, %v1080
      %v1105 = vadd.f32 %v944, %v1083
      %v1106 = vadd.f32 %v945, %v1088
      %v1107 = vadd.f32 %v946, %v1091
      %v1108 = vadd.f32 %v947, %v1096
      %v1109 = vadd.f32 %v948, %v1099
      %v1111 = vrot.slane %v186, 5
      %v1112 = vrot.slane %v1111, 4
      %v1113 = vrot.slane %v187, 5
      %v1114 = vsel %vm614, %v1112, %v1113
      %s1115 = scalar_lea.vmem %s1, 320
      %v1116 = vld [vmem:[%s1115] sm:$0xf]
      %v1117 = vld [vmem:[%s1115 + $0x4] sm:$0xf]
      %v1118 = vld [vmem:[%s1115 + $0x8] sm:$0xf]
      %v1119 = vld [vmem:[%s1115 + $0xc] sm:$0xf]
      %v1120 = vld [vmem:[%s1115 + $0x10] sm:$0xf]
      %v1121 = vld [vmem:[%s1115 + $0x14] sm:$0xf]
      %v1122 = vld [vmem:[%s1115 + $0x18] sm:$0xf]
      %v1123 = vld [vmem:[%s1115 + $0x1c] sm:$0xf]
      %v1124 = vld [vmem:[%s1115 + $0x20] sm:$0xf]
      %v1125 = vld [vmem:[%s1115 + $0x24] sm:$0xf]
      %v1126 = vld [vmem:[%s1115 + $0x28] sm:$0xf]
      %v1127 = vld [vmem:[%s1115 + $0x2c] sm:$0xf]
      %v1128 = vld [vmem:[%s1115 + $0x30] sm:$0xf]
      %v1129 = vld [vmem:[%s1115 + $0x34] sm:$0xf]
      %v1130 = vld [vmem:[%s1115 + $0x38] sm:$0xf]
      %v1131 = vld [vmem:[%s1115 + $0x3c] sm:$0xf]
      %v1132 = vunpack.c.l.b16 %v1114
      %v1133 = vpack.c.b16 %v666, %v665
      %v1134 = vpack.c.b16 %v668, %v667
      %v1135 = vpack.c.b16 %v670, %v669
      %v1136 = vpack.c.b16 %v1132, %v671
      %v1157 = vunpack.c.l.b16 %v1116
      %v1158 = vunpack.c.l.b16 %v1117
      %v1159 = vunpack.c.l.b16 %v1118
      %v1160 = vunpack.c.l.b16 %v1119
      %v1161 = vunpack.c.l.b16 %v1120
      %v1162 = vunpack.c.l.b16 %v1121
      %v1163 = vunpack.c.l.b16 %v1122
      %v1164 = vunpack.c.l.b16 %v1123
      %v1165 = vunpack.c.l.b16 %v1124
      %v1166 = vunpack.c.l.b16 %v1125
      %v1167 = vunpack.c.l.b16 %v1126
      %v1168 = vunpack.c.l.b16 %v1127
      %v1169 = vunpack.c.l.b16 %v1128
      %v1170 = vunpack.c.l.b16 %v1129
      %v1171 = vunpack.c.l.b16 %v1130
      %v1172 = vunpack.c.l.b16 %v1131
      %v1173 = vpack.c.b16 %v1158, %v1157
      %v1174 = vpack.c.b16 %v1160, %v1159
      %v1175 = vpack.c.b16 %v1162, %v1161
      %v1176 = vpack.c.b16 %v1164, %v1163
      %v1177 = vpack.c.b16 %v1166, %v1165
      %v1178 = vpack.c.b16 %v1168, %v1167
      %v1179 = vpack.c.b16 %v1170, %v1169
      %v1180 = vpack.c.b16 %v1172, %v1171
      %1189 = vmatprep.subr.bf16.mxu0 0
      %1190 = vmatpush1.bf16.msra.mxu0 %v1180
      %1191 = vmatprep.subr.bf16.mxu0 0
      %1192 = vmatpush1.bf16.msra.mxu0 %v1179
      %1193 = vmatprep.subr.bf16.mxu0 0
      %1194 = vmatpush1.bf16.msra.mxu0 %v1178
      %1195 = vmatprep.subr.bf16.mxu0 0
      %1196 = vmatpush1.bf16.msra.mxu0 %v1177
      %1197 = vmatprep.subr.bf16.mxu0 0
      %1198 = vmatpush1.bf16.msra.mxu0 %v1176
      %1199 = vmatprep.subr.bf16.mxu0 0
      %1200 = vmatpush1.bf16.msra.mxu0 %v1175
      %1201 = vmatprep.subr.bf16.mxu0 0
      %1202 = vmatpush1.bf16.msra.mxu0 %v1174
      %1203 = vmatprep.subr.bf16.mxu0 0
      %1204 = vmatpush1.bf16.msra.mxu0 %v1173
      %1205 = vmatprep.subr.bf16.mxu0 0
      %1206 = vmatpush2.bf16.msra.mxu0 0
      %1207 = vmatprep.subr.bf16.mxu0 0
      %1208 = vmatpush2.bf16.msra.mxu0 0
      %1209 = vmatprep.subr.bf16.mxu0 0
      %1210 = vmatpush2.bf16.msra.mxu0 0
      %1211 = vmatprep.subr.bf16.mxu0 0
      %1212 = vmatpush2.bf16.msra.mxu0 0
      %1213 = vmatprep.subr.bf16.mxu0 0
      %1214 = vmatpush2.bf16.msra.mxu0 0
      %1215 = vmatprep.subr.bf16.mxu0 0
      %1216 = vmatpush2.bf16.msra.mxu0 0
      %1217 = vmatprep.subr.bf16.mxu0 0
      %1218 = vmatpush2.bf16.msra.mxu0 0
      %1219 = vmatprep.subr.bf16.mxu0 0
      %1220 = vmatpush2.bf16.msra.mxu0 0
      %1221 = vmatprep.mubr.bf16.mxu0 0
      %1222 = vmatmul.mubr.bf16.gmra.mxu0 %v1133
      %v1223 = vpop.f32.mrf.mxu0
      %v1224 = vadd.f32 0.0, %v1223
      %v1225 = vpop.f32.mrf.mxu0
      %v1226 = vpop.f32.mrf.mxu0
      %v1227 = vadd.f32 0.0, %v1226
      %v1228 = vpop.f32.mrf.mxu0
      %1229 = vmatprep.mubr.bf16.mxu0 0
      %1230 = vmatmul.mubr.bf16.gmra.mxu0 %v1134
      %v1231 = vpop.f32.mrf.mxu0
      %v1232 = vadd.f32 0.0, %v1231
      %v1233 = vpop.f32.mrf.mxu0
      %v1234 = vpop.f32.mrf.mxu0
      %v1235 = vadd.f32 0.0, %v1234
      %v1236 = vpop.f32.mrf.mxu0
      %1237 = vmatprep.mubr.bf16.mxu0 0
      %1238 = vmatmul.mubr.bf16.gmra.mxu0 %v1135
      %v1239 = vpop.f32.mrf.mxu0
      %v1240 = vadd.f32 0.0, %v1239
      %v1241 = vpop.f32.mrf.mxu0
      %v1242 = vpop.f32.mrf.mxu0
      %v1243 = vadd.f32 0.0, %v1242
      %v1244 = vpop.f32.mrf.mxu0
      %1245 = vmatprep.mubr.bf16.mxu0 0
      %1246 = vmatmul.mubr.bf16.gmra.mxu0 %v1136
      %v1247 = vpop.f32.mrf.mxu0
      %v1248 = vadd.f32 0.0, %v1247
      %v1249 = vpop.f32.mrf.mxu0
      %v1250 = vpop.f32.mrf.mxu0
      %v1251 = vadd.f32 0.0, %v1250
      %v1252 = vpop.f32.mrf.mxu0
      %1253 = vdwg.mxu0
      %v1254 = vadd.f32 %v1102, %v1224
      %v1255 = vadd.f32 %v1103, %v1227
      %v1256 = vadd.f32 %v1104, %v1232
      %v1257 = vadd.f32 %v1105, %v1235
      %v1258 = vadd.f32 %v1106, %v1240
      %v1259 = vadd.f32 %v1107, %v1243
      %v1260 = vadd.f32 %v1108, %v1248
      %v1261 = vadd.f32 %v1109, %v1251
      %s1262 = scalar_lea.vmem %s1, 384
      %v1263 = vld [vmem:[%s1262] sm:$0xf]
      %v1264 = vld [vmem:[%s1262 + $0x4] sm:$0xf]
      %v1265 = vld [vmem:[%s1262 + $0x8] sm:$0xf]
      %v1266 = vld [vmem:[%s1262 + $0xc] sm:$0xf]
      %v1267 = vld [vmem:[%s1262 + $0x10] sm:$0xf]
      %v1268 = vld [vmem:[%s1262 + $0x14] sm:$0xf]
      %v1269 = vld [vmem:[%s1262 + $0x18] sm:$0xf]
      %v1270 = vld [vmem:[%s1262 + $0x1c] sm:$0xf]
      %v1271 = vld [vmem:[%s1262 + $0x20] sm:$0xf]
      %v1272 = vld [vmem:[%s1262 + $0x24] sm:$0xf]
      %v1273 = vld [vmem:[%s1262 + $0x28] sm:$0xf]
      %v1274 = vld [vmem:[%s1262 + $0x2c] sm:$0xf]
      %v1275 = vld [vmem:[%s1262 + $0x30] sm:$0xf]
      %v1276 = vld [vmem:[%s1262 + $0x34] sm:$0xf]
      %v1277 = vld [vmem:[%s1262 + $0x38] sm:$0xf]
      %v1278 = vld [vmem:[%s1262 + $0x3c] sm:$0xf]
      %v1280 = vunpack.c.l.b16 %v188
      %v1281 = vpack.c.b16 %v1280, %v819
      %v1299 = vunpack.c.l.b16 %v1263
      %v1300 = vunpack.c.l.b16 %v1264
      %v1301 = vunpack.c.l.b16 %v1265
      %v1302 = vunpack.c.l.b16 %v1266
      %v1303 = vunpack.c.l.b16 %v1267
      %v1304 = vunpack.c.l.b16 %v1268
      %v1305 = vunpack.c.l.b16 %v1269
      %v1306 = vunpack.c.l.b16 %v1270
      %v1307 = vunpack.c.l.b16 %v1271
      %v1308 = vunpack.c.l.b16 %v1272
      %v1309 = vunpack.c.l.b16 %v1273
      %v1310 = vunpack.c.l.b16 %v1274
      %v1311 = vunpack.c.l.b16 %v1275
      %v1312 = vunpack.c.l.b16 %v1276
      %v1313 = vunpack.c.l.b16 %v1277
      %v1314 = vunpack.c.l.b16 %v1278
      %v1315 = vpack.c.b16 %v1300, %v1299
      %v1316 = vpack.c.b16 %v1302, %v1301
      %v1317 = vpack.c.b16 %v1304, %v1303
      %v1318 = vpack.c.b16 %v1306, %v1305
      %v1319 = vpack.c.b16 %v1308, %v1307
      %v1320 = vpack.c.b16 %v1310, %v1309
      %v1321 = vpack.c.b16 %v1312, %v1311
      %v1322 = vpack.c.b16 %v1314, %v1313
      %1331 = vmatprep.subr.bf16.mxu0 0
      %1332 = vmatpush1.bf16.msra.mxu0 %v1322
      %1333 = vmatprep.subr.bf16.mxu0 0
      %1334 = vmatpush1.bf16.msra.mxu0 %v1321
      %1335 = vmatprep.subr.bf16.mxu0 0
      %1336 = vmatpush1.bf16.msra.mxu0 %v1320
      %1337 = vmatprep.subr.bf16.mxu0 0
      %1338 = vmatpush1.bf16.msra.mxu0 %v1319
      %1339 = vmatprep.subr.bf16.mxu0 0
      %1340 = vmatpush1.bf16.msra.mxu0 %v1318
      %1341 = vmatprep.subr.bf16.mxu0 0
      %1342 = vmatpush1.bf16.msra.mxu0 %v1317
      %1343 = vmatprep.subr.bf16.mxu0 0
      %1344 = vmatpush1.bf16.msra.mxu0 %v1316
      %1345 = vmatprep.subr.bf16.mxu0 0
      %1346 = vmatpush1.bf16.msra.mxu0 %v1315
      %1347 = vmatprep.subr.bf16.mxu0 0
      %1348 = vmatpush2.bf16.msra.mxu0 0
      %1349 = vmatprep.subr.bf16.mxu0 0
      %1350 = vmatpush2.bf16.msra.mxu0 0
      %1351 = vmatprep.subr.bf16.mxu0 0
      %1352 = vmatpush2.bf16.msra.mxu0 0
      %1353 = vmatprep.subr.bf16.mxu0 0
      %1354 = vmatpush2.bf16.msra.mxu0 0
      %1355 = vmatprep.subr.bf16.mxu0 0
      %1356 = vmatpush2.bf16.msra.mxu0 0
      %1357 = vmatprep.subr.bf16.mxu0 0
      %1358 = vmatpush2.bf16.msra.mxu0 0
      %1359 = vmatprep.subr.bf16.mxu0 0
      %1360 = vmatpush2.bf16.msra.mxu0 0
      %1361 = vmatprep.subr.bf16.mxu0 0
      %1362 = vmatpush2.bf16.msra.mxu0 0
      %1363 = vmatprep.mubr.bf16.mxu0 0
      %1364 = vmatmul.mubr.bf16.gmra.mxu0 %v484
      %v1365 = vpop.f32.mrf.mxu0
      %v1366 = vadd.f32 0.0, %v1365
      %v1367 = vpop.f32.mrf.mxu0
      %v1368 = vpop.f32.mrf.mxu0
      %v1369 = vadd.f32 0.0, %v1368
      %v1370 = vpop.f32.mrf.mxu0
      %1371 = vmatprep.mubr.bf16.mxu0 0
      %1372 = vmatmul.mubr.bf16.gmra.mxu0 %v485
      %v1373 = vpop.f32.mrf.mxu0
      %v1374 = vadd.f32 0.0, %v1373
      %v1375 = vpop.f32.mrf.mxu0
      %v1376 = vpop.f32.mrf.mxu0
      %v1377 = vadd.f32 0.0, %v1376
      %v1378 = vpop.f32.mrf.mxu0
      %1379 = vmatprep.mubr.bf16.mxu0 0
      %1380 = vmatmul.mubr.bf16.gmra.mxu0 %v486
      %v1381 = vpop.f32.mrf.mxu0
      %v1382 = vadd.f32 0.0, %v1381
      %v1383 = vpop.f32.mrf.mxu0
      %v1384 = vpop.f32.mrf.mxu0
      %v1385 = vadd.f32 0.0, %v1384
      %v1386 = vpop.f32.mrf.mxu0
      %1387 = vmatprep.mubr.bf16.mxu0 0
      %1388 = vmatmul.mubr.bf16.gmra.mxu0 %v1281
      %v1389 = vpop.f32.mrf.mxu0
      %v1390 = vadd.f32 0.0, %v1389
      %v1391 = vpop.f32.mrf.mxu0
      %v1392 = vpop.f32.mrf.mxu0
      %v1393 = vadd.f32 0.0, %v1392
      %v1394 = vpop.f32.mrf.mxu0
      %1395 = vdwg.mxu0
      %v1396 = vadd.f32 %v1254, %v1366
      %v1397 = vadd.f32 %v1255, %v1369
      %v1398 = vadd.f32 %v1256, %v1374
      %v1399 = vadd.f32 %v1257, %v1377
      %v1400 = vadd.f32 %v1258, %v1382
      %v1401 = vadd.f32 %v1259, %v1385
      %v1402 = vadd.f32 %v1260, %v1390
      %v1403 = vadd.f32 %v1261, %v1393
      %v1405 = vshrl.u32 %v188, 16
      %v1407 = vrot.slane %v1405, 4
      %v1408 = vshll.u32 %v188, 16
      %v1410 = vrot.slane %v1408, 5
      %v1411 = vor.u32 %v1407, %v1410
      %v1412 = vrot.slane %v1411, 4
      %v1414 = vshll.u32 %v189, 16
      %v1416 = vrot.slane %v1414, 5
      %v1417 = vsel %vm208, %v1412, %v1416
      %s1418 = scalar_lea.vmem %s1, 448
      %v1419 = vld [vmem:[%s1418] sm:$0xf]
      %v1420 = vld [vmem:[%s1418 + $0x4] sm:$0xf]
      %v1421 = vld [vmem:[%s1418 + $0x8] sm:$0xf]
      %v1422 = vld [vmem:[%s1418 + $0xc] sm:$0xf]
      %v1423 = vld [vmem:[%s1418 + $0x10] sm:$0xf]
      %v1424 = vld [vmem:[%s1418 + $0x14] sm:$0xf]
      %v1425 = vld [vmem:[%s1418 + $0x18] sm:$0xf]
      %v1426 = vld [vmem:[%s1418 + $0x1c] sm:$0xf]
      %v1427 = vld [vmem:[%s1418 + $0x20] sm:$0xf]
      %v1428 = vld [vmem:[%s1418 + $0x24] sm:$0xf]
      %v1429 = vld [vmem:[%s1418 + $0x28] sm:$0xf]
      %v1430 = vld [vmem:[%s1418 + $0x2c] sm:$0xf]
      %v1431 = vld [vmem:[%s1418 + $0x30] sm:$0xf]
      %v1432 = vld [vmem:[%s1418 + $0x34] sm:$0xf]
      %v1433 = vld [vmem:[%s1418 + $0x38] sm:$0xf]
      %v1434 = vld [vmem:[%s1418 + $0x3c] sm:$0xf]
      %v1435 = vunpack.c.l.b16 %v1417
      %v1436 = vpack.c.b16 %v1435, %v980
      %v1454 = vunpack.c.l.b16 %v1419
      %v1455 = vunpack.c.l.b16 %v1420
      %v1456 = vunpack.c.l.b16 %v1421
      %v1457 = vunpack.c.l.b16 %v1422
      %v1458 = vunpack.c.l.b16 %v1423
      %v1459 = vunpack.c.l.b16 %v1424
      %v1460 = vunpack.c.l.b16 %v1425
      %v1461 = vunpack.c.l.b16 %v1426
      %v1462 = vunpack.c.l.b16 %v1427
      %v1463 = vunpack.c.l.b16 %v1428
      %v1464 = vunpack.c.l.b16 %v1429
      %v1465 = vunpack.c.l.b16 %v1430
      %v1466 = vunpack.c.l.b16 %v1431
      %v1467 = vunpack.c.l.b16 %v1432
      %v1468 = vunpack.c.l.b16 %v1433
      %v1469 = vunpack.c.l.b16 %v1434
      %v1470 = vpack.c.b16 %v1455, %v1454
      %v1471 = vpack.c.b16 %v1457, %v1456
      %v1472 = vpack.c.b16 %v1459, %v1458
      %v1473 = vpack.c.b16 %v1461, %v1460
      %v1474 = vpack.c.b16 %v1463, %v1462
      %v1475 = vpack.c.b16 %v1465, %v1464
      %v1476 = vpack.c.b16 %v1467, %v1466
      %v1477 = vpack.c.b16 %v1469, %v1468
      %1486 = vmatprep.subr.bf16.mxu0 0
      %1487 = vmatpush1.bf16.msra.mxu0 %v1477
      %1488 = vmatprep.subr.bf16.mxu0 0
      %1489 = vmatpush1.bf16.msra.mxu0 %v1476
      %1490 = vmatprep.subr.bf16.mxu0 0
      %1491 = vmatpush1.bf16.msra.mxu0 %v1475
      %1492 = vmatprep.subr.bf16.mxu0 0
      %1493 = vmatpush1.bf16.msra.mxu0 %v1474
      %1494 = vmatprep.subr.bf16.mxu0 0
      %1495 = vmatpush1.bf16.msra.mxu0 %v1473
      %1496 = vmatprep.subr.bf16.mxu0 0
      %1497 = vmatpush1.bf16.msra.mxu0 %v1472
      %1498 = vmatprep.subr.bf16.mxu0 0
      %1499 = vmatpush1.bf16.msra.mxu0 %v1471
      %1500 = vmatprep.subr.bf16.mxu0 0
      %1501 = vmatpush1.bf16.msra.mxu0 %v1470
      %1502 = vmatprep.subr.bf16.mxu0 0
      %1503 = vmatpush2.bf16.msra.mxu0 0
      %1504 = vmatprep.subr.bf16.mxu0 0
      %1505 = vmatpush2.bf16.msra.mxu0 0
      %1506 = vmatprep.subr.bf16.mxu0 0
      %1507 = vmatpush2.bf16.msra.mxu0 0
      %1508 = vmatprep.subr.bf16.mxu0 0
      %1509 = vmatpush2.bf16.msra.mxu0 0
      %1510 = vmatprep.subr.bf16.mxu0 0
      %1511 = vmatpush2.bf16.msra.mxu0 0
      %1512 = vmatprep.subr.bf16.mxu0 0
      %1513 = vmatpush2.bf16.msra.mxu0 0
      %1514 = vmatprep.subr.bf16.mxu0 0
      %1515 = vmatpush2.bf16.msra.mxu0 0
      %1516 = vmatprep.subr.bf16.mxu0 0
      %1517 = vmatpush2.bf16.msra.mxu0 0
      %1518 = vmatprep.mubr.bf16.mxu0 0
      %1519 = vmatmul.mubr.bf16.gmra.mxu0 %v347
      %v1520 = vpop.f32.mrf.mxu0
      %v1521 = vadd.f32 0.0, %v1520
      %v1522 = vpop.f32.mrf.mxu0
      %v1523 = vpop.f32.mrf.mxu0
      %v1524 = vadd.f32 0.0, %v1523
      %v1525 = vpop.f32.mrf.mxu0
      %1526 = vmatprep.mubr.bf16.mxu0 0
      %1527 = vmatmul.mubr.bf16.gmra.mxu0 %v348
      %v1528 = vpop.f32.mrf.mxu0
      %v1529 = vadd.f32 0.0, %v1528
      %v1530 = vpop.f32.mrf.mxu0
      %v1531 = vpop.f32.mrf.mxu0
      %v1532 = vadd.f32 0.0, %v1531
      %v1533 = vpop.f32.mrf.mxu0
      %1534 = vmatprep.mubr.bf16.mxu0 0
      %1535 = vmatmul.mubr.bf16.gmra.mxu0 %v349
      %v1536 = vpop.f32.mrf.mxu0
      %v1537 = vadd.f32 0.0, %v1536
      %v1538 = vpop.f32.mrf.mxu0
      %v1539 = vpop.f32.mrf.mxu0
      %v1540 = vadd.f32 0.0, %v1539
      %v1541 = vpop.f32.mrf.mxu0
      %1542 = vmatprep.mubr.bf16.mxu0 0
      %1543 = vmatmul.mubr.bf16.gmra.mxu0 %v1436
      %v1544 = vpop.f32.mrf.mxu0
      %v1545 = vadd.f32 0.0, %v1544
      %v1546 = vpop.f32.mrf.mxu0
      %v1547 = vpop.f32.mrf.mxu0
      %v1548 = vadd.f32 0.0, %v1547
      %v1549 = vpop.f32.mrf.mxu0
      %1550 = vdwg.mxu0
      %v1551 = vadd.f32 %v1396, %v1521
      %v1552 = vadd.f32 %v1397, %v1524
      %v1553 = vadd.f32 %v1398, %v1529
      %v1554 = vadd.f32 %v1399, %v1532
      %v1555 = vadd.f32 %v1400, %v1537
      %v1556 = vadd.f32 %v1401, %v1540
      %v1557 = vadd.f32 %v1402, %v1545
      %v1558 = vadd.f32 %v1403, %v1548
      %v1560 = vrot.slane %v188, 5
      %v1561 = vrot.slane %v1560, 4
      %v1562 = vrot.slane %v189, 5
      %v1563 = vsel %vm614, %v1561, %v1562
      %s1564 = scalar_lea.vmem %s1, 512
      %v1565 = vld [vmem:[%s1564] sm:$0xf]
      %v1566 = vld [vmem:[%s1564 + $0x4] sm:$0xf]
      %v1567 = vld [vmem:[%s1564 + $0x8] sm:$0xf]
      %v1568 = vld [vmem:[%s1564 + $0xc] sm:$0xf]
      %v1569 = vld [vmem:[%s1564 + $0x10] sm:$0xf]
      %v1570 = vld [vmem:[%s1564 + $0x14] sm:$0xf]
      %v1571 = vld [vmem:[%s1564 + $0x18] sm:$0xf]
      %v1572 = vld [vmem:[%s1564 + $0x1c] sm:$0xf]
      %v1573 = vld [vmem:[%s1564 + $0x20] sm:$0xf]
      %v1574 = vld [vmem:[%s1564 + $0x24] sm:$0xf]
      %v1575 = vld [vmem:[%s1564 + $0x28] sm:$0xf]
      %v1576 = vld [vmem:[%s1564 + $0x2c] sm:$0xf]
      %v1577 = vld [vmem:[%s1564 + $0x30] sm:$0xf]
      %v1578 = vld [vmem:[%s1564 + $0x34] sm:$0xf]
      %v1579 = vld [vmem:[%s1564 + $0x38] sm:$0xf]
      %v1580 = vld [vmem:[%s1564 + $0x3c] sm:$0xf]
      %v1581 = vunpack.c.l.b16 %v1563
      %v1582 = vpack.c.b16 %v1581, %v1132
      %v1600 = vunpack.c.l.b16 %v1565
      %v1601 = vunpack.c.l.b16 %v1566
      %v1602 = vunpack.c.l.b16 %v1567
      %v1603 = vunpack.c.l.b16 %v1568
      %v1604 = vunpack.c.l.b16 %v1569
      %v1605 = vunpack.c.l.b16 %v1570
      %v1606 = vunpack.c.l.b16 %v1571
      %v1607 = vunpack.c.l.b16 %v1572
      %v1608 = vunpack.c.l.b16 %v1573
      %v1609 = vunpack.c.l.b16 %v1574
      %v1610 = vunpack.c.l.b16 %v1575
      %v1611 = vunpack.c.l.b16 %v1576
      %v1612 = vunpack.c.l.b16 %v1577
      %v1613 = vunpack.c.l.b16 %v1578
      %v1614 = vunpack.c.l.b16 %v1579
      %v1615 = vunpack.c.l.b16 %v1580
      %v1616 = vpack.c.b16 %v1601, %v1600
      %v1617 = vpack.c.b16 %v1603, %v1602
      %v1618 = vpack.c.b16 %v1605, %v1604
      %v1619 = vpack.c.b16 %v1607, %v1606
      %v1620 = vpack.c.b16 %v1609, %v1608
      %v1621 = vpack.c.b16 %v1611, %v1610
      %v1622 = vpack.c.b16 %v1613, %v1612
      %v1623 = vpack.c.b16 %v1615, %v1614
      %1632 = vmatprep.subr.bf16.mxu0 0
      %1633 = vmatpush1.bf16.msra.mxu0 %v1623
      %1634 = vmatprep.subr.bf16.mxu0 0
      %1635 = vmatpush1.bf16.msra.mxu0 %v1622
      %1636 = vmatprep.subr.bf16.mxu0 0
      %1637 = vmatpush1.bf16.msra.mxu0 %v1621
      %1638 = vmatprep.subr.bf16.mxu0 0
      %1639 = vmatpush1.bf16.msra.mxu0 %v1620
      %1640 = vmatprep.subr.bf16.mxu0 0
      %1641 = vmatpush1.bf16.msra.mxu0 %v1619
      %1642 = vmatprep.subr.bf16.mxu0 0
      %1643 = vmatpush1.bf16.msra.mxu0 %v1618
      %1644 = vmatprep.subr.bf16.mxu0 0
      %1645 = vmatpush1.bf16.msra.mxu0 %v1617
      %1646 = vmatprep.subr.bf16.mxu0 0
      %1647 = vmatpush1.bf16.msra.mxu0 %v1616
      %1648 = vmatprep.subr.bf16.mxu0 0
      %1649 = vmatpush2.bf16.msra.mxu0 0
      %1650 = vmatprep.subr.bf16.mxu0 0
      %1651 = vmatpush2.bf16.msra.mxu0 0
      %1652 = vmatprep.subr.bf16.mxu0 0
      %1653 = vmatpush2.bf16.msra.mxu0 0
      %1654 = vmatprep.subr.bf16.mxu0 0
      %1655 = vmatpush2.bf16.msra.mxu0 0
      %1656 = vmatprep.subr.bf16.mxu0 0
      %1657 = vmatpush2.bf16.msra.mxu0 0
      %1658 = vmatprep.subr.bf16.mxu0 0
      %1659 = vmatpush2.bf16.msra.mxu0 0
      %1660 = vmatprep.subr.bf16.mxu0 0
      %1661 = vmatpush2.bf16.msra.mxu0 0
      %1662 = vmatprep.subr.bf16.mxu0 0
      %1663 = vmatpush2.bf16.msra.mxu0 0
      %1664 = vmatprep.mubr.bf16.mxu0 0
      %1665 = vmatmul.mubr.bf16.gmra.mxu0 %v673
      %v1666 = vpop.f32.mrf.mxu0
      %v1667 = vadd.f32 0.0, %v1666
      %v1668 = vpop.f32.mrf.mxu0
      %v1669 = vpop.f32.mrf.mxu0
      %v1670 = vadd.f32 0.0, %v1669
      %v1671 = vpop.f32.mrf.mxu0
      %1672 = vmatprep.mubr.bf16.mxu0 0
      %1673 = vmatmul.mubr.bf16.gmra.mxu0 %v674
      %v1674 = vpop.f32.mrf.mxu0
      %v1675 = vadd.f32 0.0, %v1674
      %v1676 = vpop.f32.mrf.mxu0
      %v1677 = vpop.f32.mrf.mxu0
      %v1678 = vadd.f32 0.0, %v1677
      %v1679 = vpop.f32.mrf.mxu0
      %1680 = vmatprep.mubr.bf16.mxu0 0
      %1681 = vmatmul.mubr.bf16.gmra.mxu0 %v675
      %v1682 = vpop.f32.mrf.mxu0
      %v1683 = vadd.f32 0.0, %v1682
      %v1684 = vpop.f32.mrf.mxu0
      %v1685 = vpop.f32.mrf.mxu0
      %v1686 = vadd.f32 0.0, %v1685
      %v1687 = vpop.f32.mrf.mxu0
      %1688 = vmatprep.mubr.bf16.mxu0 0
      %1689 = vmatmul.mubr.bf16.gmra.mxu0 %v1582
      %v1690 = vpop.f32.mrf.mxu0
      %v1691 = vadd.f32 0.0, %v1690
      %v1692 = vpop.f32.mrf.mxu0
      %v1693 = vpop.f32.mrf.mxu0
      %v1694 = vadd.f32 0.0, %v1693
      %v1695 = vpop.f32.mrf.mxu0
      %1696 = vdwg.mxu0
      %v1697 = vadd.f32 %v1551, %v1667
      %v1698 = vadd.f32 %v1552, %v1670
      %v1699 = vadd.f32 %v1553, %v1675
      %v1700 = vadd.f32 %v1554, %v1678
      %v1701 = vadd.f32 %v1555, %v1683
      %v1702 = vadd.f32 %v1556, %v1686
      %v1703 = vadd.f32 %v1557, %v1691
      %v1704 = vadd.f32 %v1558, %v1694
      %v1705 = vld [vmem:[%s2] sm:$0x1]
      %v1707 = vlaneseq
      %v1708 = vshrl.u32 %v1707, 7
      %v1709 = vsub.s32 0, %v1708
      %v1710 = vrot.slane %v1705, %v1709
      %v1712 = vadd.f32 %v1697, %v1710
      %v1713 = vadd.f32 %v1698, %v1710
      %v1714 = vadd.f32 %v1699, %v1710
      %v1715 = vadd.f32 %v1700, %v1710
      %v1716 = vadd.f32 %v1701, %v1710
      %v1717 = vadd.f32 %v1702, %v1710
      %v1718 = vadd.f32 %v1703, %v1710
      %v1719 = vadd.f32 %v1704, %v1710
      %vm1720 = vcmask 523264
      %v1721 = vsel %vm1720, %v1712, 0.0
      %v1722 = vsel %vm1720, %v1713, 0.0
      %v1723 = vadd.f32 %v1721, %v1722
      %v1724 = vsel %vm1720, %v1714, 0.0
      %v1725 = vadd.f32 %v1723, %v1724
      %v1726 = vsel %vm1720, %v1715, 0.0
      %v1727 = vadd.f32 %v1725, %v1726
      %v1728 = vsel %vm1720, %v1716, 0.0
      %v1729 = vadd.f32 %v1727, %v1728
      %v1730 = vsel %vm1720, %v1717, 0.0
      %v1731 = vadd.f32 %v1729, %v1730
      %v1732 = vsel %vm1720, %v1718, 0.0
      %v1733 = vadd.f32 %v1731, %v1732
      %v1734 = vsel %vm1720, %v1719, 0.0
      %v1735 = vadd.f32 %v1733, %v1734
      %v1736 = vrot.slane %v1735, 4
      %v1737 = vadd.f32 %v1735, %v1736
      %v1738 = vrot.slane %v1737, 2
      %v1739 = vadd.f32 %v1737, %v1738
      %v1740 = vrot.slane %v1739, 1
      %v1741 = vadd.f32 %v1739, %v1740
      %v1742 = vmul.f32 %v1712, %v1712
      %v1743 = vmul.f32 %v1713, %v1713
      %v1744 = vmul.f32 %v1714, %v1714
      %v1745 = vmul.f32 %v1715, %v1715
      %v1746 = vmul.f32 %v1716, %v1716
      %v1747 = vmul.f32 %v1717, %v1717
      %v1748 = vmul.f32 %v1718, %v1718
      %v1749 = vmul.f32 %v1719, %v1719
      %v1750 = vsel %vm1720, %v1742, 0.0
      %v1751 = vsel %vm1720, %v1743, 0.0
      %v1752 = vadd.f32 %v1750, %v1751
      %v1753 = vsel %vm1720, %v1744, 0.0
      %v1754 = vadd.f32 %v1752, %v1753
      %v1755 = vsel %vm1720, %v1745, 0.0
      %v1756 = vadd.f32 %v1754, %v1755
      %v1757 = vsel %vm1720, %v1746, 0.0
      %v1758 = vadd.f32 %v1756, %v1757
      %v1759 = vsel %vm1720, %v1747, 0.0
      %v1760 = vadd.f32 %v1758, %v1759
      %v1761 = vsel %vm1720, %v1748, 0.0
      %v1762 = vadd.f32 %v1760, %v1761
      %v1763 = vsel %vm1720, %v1749, 0.0
      %v1764 = vadd.f32 %v1762, %v1763
      %v1765 = vrot.slane %v1764, 4
      %v1766 = vadd.f32 %v1764, %v1765
      %v1767 = vrot.slane %v1766, 2
      %v1768 = vadd.f32 %v1766, %v1767
      %v1769 = vrot.slane %v1768, 1
      %v1770 = vadd.f32 %v1768, %v1769
      %1772 = vrot.lane.b32.xlu0 %v1741, 120
      %v1773 = vpop.permute.xlu0 %1772
      %v1775 = vadd.f32 %v1741, %v1773
      %1777 = vrot.lane.b32.xlu0 %v1770, 120
      %v1778 = vpop.permute.xlu0 %1777
      %v1780 = vadd.f32 %v1770, %v1778
      %1781 = vrot.lane.b32.xlu0 %v1741, 112
      %v1782 = vpop.permute.xlu0 %1781
      %v1784 = vadd.f32 %v1775, %v1782
      %1785 = vrot.lane.b32.xlu0 %v1770, 112
      %v1786 = vpop.permute.xlu0 %1785
      %v1788 = vadd.f32 %v1780, %v1786
      %1789 = vrot.lane.b32.xlu0 %v1741, 104
      %v1790 = vpop.permute.xlu0 %1789
      %v1792 = vadd.f32 %v1784, %v1790
      %1793 = vrot.lane.b32.xlu0 %v1770, 104
      %v1794 = vpop.permute.xlu0 %1793
      %v1796 = vadd.f32 %v1788, %v1794
      %1797 = vrot.lane.b32.xlu0 %v1741, 96
      %v1798 = vpop.permute.xlu0 %1797
      %v1800 = vadd.f32 %v1792, %v1798
      %1801 = vrot.lane.b32.xlu0 %v1770, 96
      %v1802 = vpop.permute.xlu0 %1801
      %v1804 = vadd.f32 %v1796, %v1802
      %1805 = vrot.lane.b32.xlu0 %v1741, 88
      %v1806 = vpop.permute.xlu0 %1805
      %v1808 = vadd.f32 %v1800, %v1806
      %1809 = vrot.lane.b32.xlu0 %v1770, 88
      %v1810 = vpop.permute.xlu0 %1809
      %v1812 = vadd.f32 %v1804, %v1810
      %1813 = vrot.lane.b32.xlu0 %v1741, 80
      %v1814 = vpop.permute.xlu0 %1813
      %v1816 = vadd.f32 %v1808, %v1814
      %1817 = vrot.lane.b32.xlu0 %v1770, 80
      %v1818 = vpop.permute.xlu0 %1817
      %v1820 = vadd.f32 %v1812, %v1818
      %1821 = vrot.lane.b32.xlu0 %v1741, 72
      %v1822 = vpop.permute.xlu0 %1821
      %v1824 = vadd.f32 %v1816, %v1822
      %1825 = vrot.lane.b32.xlu0 %v1770, 72
      %v1826 = vpop.permute.xlu0 %1825
      %v1828 = vadd.f32 %v1820, %v1826
      %v1829 = vrcp.pop 512.0
      %v1830 = vmul.f32 %v1824, %v1829
      %v1831 = vmul.f32 %v1828, %v1829
      %v1832 = vmul.f32 %v1830, %v1830
      %v1833 = vsub.f32 %v1831, %v1832
      %v1834 = vmax.f32 %v1833, 0.0
      %v1835 = vadd.f32 %v1834, 1e-05
      %v1836 = vrsqrt.pop %v1835
      %1838 = vrot.lane.b32.xlu0 %v1830, 8
      %v1839 = vpop.permute.xlu0 %1838
      %1841 = vrot.lane.b32.xlu0 %v1830, 16
      %v1842 = vpop.permute.xlu0 %1841
      %1844 = vrot.lane.b32.xlu0 %v1830, 24
      %v1845 = vpop.permute.xlu0 %1844
      %1847 = vrot.lane.b32.xlu0 %v1830, 32
      %v1848 = vpop.permute.xlu0 %1847
      %1850 = vrot.lane.b32.xlu0 %v1830, 40
      %v1851 = vpop.permute.xlu0 %1850
      %1853 = vrot.lane.b32.xlu0 %v1830, 48
      %v1854 = vpop.permute.xlu0 %1853
      %1856 = vrot.lane.b32.xlu0 %v1830, 56
      %v1857 = vpop.permute.xlu0 %1856
      %vm1859 = vcmask 64512
      %v1860 = vsel %vm1859, %v1830, %v1839
      %vm1861 = vcmask 130048
      %v1862 = vsel %vm1861, %v1860, %v1842
      %vm1863 = vcmask 195584
      %v1864 = vsel %vm1863, %v1862, %v1845
      %vm1865 = vcmask 261120
      %v1866 = vsel %vm1865, %v1864, %v1848
      %vm1867 = vcmask 326656
      %v1868 = vsel %vm1867, %v1866, %v1851
      %vm1869 = vcmask 392192
      %v1870 = vsel %vm1869, %v1868, %v1854
      %vm1871 = vcmask 457728
      %v1872 = vsel %vm1871, %v1870, %v1857
      %1874 = vrot.lane.b32.xlu0 %v1836, 8
      %v1875 = vpop.permute.xlu0 %1874
      %1877 = vrot.lane.b32.xlu0 %v1836, 16
      %v1878 = vpop.permute.xlu0 %1877
      %1880 = vrot.lane.b32.xlu0 %v1836, 24
      %v1881 = vpop.permute.xlu0 %1880
      %1883 = vrot.lane.b32.xlu0 %v1836, 32
      %v1884 = vpop.permute.xlu0 %1883
      %1886 = vrot.lane.b32.xlu0 %v1836, 40
      %v1887 = vpop.permute.xlu0 %1886
      %1889 = vrot.lane.b32.xlu0 %v1836, 48
      %v1890 = vpop.permute.xlu0 %1889
      %1892 = vrot.lane.b32.xlu0 %v1836, 56
      %v1893 = vpop.permute.xlu0 %1892
      %v1895 = vsel %vm1859, %v1836, %v1875
      %v1896 = vsel %vm1861, %v1895, %v1878
      %v1897 = vsel %vm1863, %v1896, %v1881
      %v1898 = vsel %vm1865, %v1897, %v1884
      %v1899 = vsel %vm1867, %v1898, %v1887
      %v1900 = vsel %vm1869, %v1899, %v1890
      %v1901 = vsel %vm1871, %v1900, %v1893
      %v1902 = vlaneseq
      %v1903 = vshrl.u32 %v1902, 7
      %v1904 = vsub.s32 0, %v1903
      %v1905 = vrot.slane %v1872, %v1904
      %v1906 = vsub.f32 %v1712, %v1905
      %v1907 = vsub.f32 %v1713, %v1905
      %v1908 = vsub.f32 %v1714, %v1905
      %v1909 = vsub.f32 %v1715, %v1905
      %v1910 = vsub.f32 %v1716, %v1905
      %v1911 = vsub.f32 %v1717, %v1905
      %v1912 = vsub.f32 %v1718, %v1905
      %v1913 = vsub.f32 %v1719, %v1905
      %v1914 = vlaneseq
      %v1915 = vshrl.u32 %v1914, 7
      %v1916 = vsub.s32 0, %v1915
      %v1917 = vrot.slane %v1901, %v1916
      %v1918 = vmul.f32 %v1906, %v1917
      %v1919 = vmul.f32 %v1907, %v1917
      %v1920 = vmul.f32 %v1908, %v1917
      %v1921 = vmul.f32 %v1909, %v1917
      %v1922 = vmul.f32 %v1910, %v1917
      %v1923 = vmul.f32 %v1911, %v1917
      %v1924 = vmul.f32 %v1912, %v1917
      %v1925 = vmul.f32 %v1913, %v1917
      %v1926 = vmax.f32 %v1918, 0.0
      %v1927 = vmax.f32 %v1919, 0.0
      %v1928 = vmax.f32 %v1920, 0.0
      %v1929 = vmax.f32 %v1921, 0.0
      %v1930 = vmax.f32 %v1922, 0.0
      %v1931 = vmax.f32 %v1923, 0.0
      %v1932 = vmax.f32 %v1924, 0.0
      %v1933 = vmax.f32 %v1925, 0.0
      %1942 = vrot.lane.b32.xlu0 %v1926, 96
      %v1943 = vpop.permute.xlu0 %1942
      %1944 = vrot.lane.b32.xlu0 %v1927, 96
      %v1945 = vpop.permute.xlu0 %1944
      %1946 = vrot.lane.b32.xlu0 %v1928, 96
      %v1947 = vpop.permute.xlu0 %1946
      %1948 = vrot.lane.b32.xlu0 %v1929, 96
      %v1949 = vpop.permute.xlu0 %1948
      %1950 = vrot.lane.b32.xlu0 %v1930, 96
      %v1951 = vpop.permute.xlu0 %1950
      %1952 = vrot.lane.b32.xlu0 %v1931, 96
      %v1953 = vpop.permute.xlu0 %1952
      %1954 = vrot.lane.b32.xlu0 %v1932, 96
      %v1955 = vpop.permute.xlu0 %1954
      %1956 = vrot.lane.b32.xlu0 %v1933, 96
      %v1957 = vpop.permute.xlu0 %1956
      %v1966 = vmax.f32 %v1926, %v1943
      %v1967 = vmax.f32 %v1927, %v1945
      %v1968 = vmax.f32 %v1928, %v1947
      %v1969 = vmax.f32 %v1929, %v1949
      %v1970 = vmax.f32 %v1930, %v1951
      %v1971 = vmax.f32 %v1931, %v1953
      %v1972 = vmax.f32 %v1932, %v1955
      %v1973 = vmax.f32 %v1933, %v1957
      %v1982 = vcombine.high %v1966, %v1966
      %v1984 = vunpack.c.l.s4 1983009808
      %v1985 = vunpack.c.0.s8 %v1984
      %v1986 = vlaneseq
      %v1987 = vshrl.u32 %v1986, 7
      %v1988 = vsub.s32 %v1985, %v1987
      %v1989 = vrot.slane %v1966, %v1988
      %v1991 = vunpack.c.l.s4 1983009808
      %v1992 = vunpack.c.0.s8 %v1991
      %v1993 = vlaneseq
      %v1994 = vshrl.u32 %v1993, 7
      %v1995 = vsub.s32 %v1992, %v1994
      %v1996 = vrot.slane %v1982, %v1995
      %v1997 = vcombine.high %v1989, %v1989
      %v1998 = vcombine.high %v1996, %v1996
      %v1999 = vcombine.high %v1967, %v1967
      %v2001 = vunpack.c.l.s4 1983009808
      %v2002 = vunpack.c.0.s8 %v2001
      %v2003 = vlaneseq
      %v2004 = vshrl.u32 %v2003, 7
      %v2005 = vsub.s32 %v2002, %v2004
      %v2006 = vrot.slane %v1967, %v2005
      %v2008 = vunpack.c.l.s4 1983009808
      %v2009 = vunpack.c.0.s8 %v2008
      %v2010 = vlaneseq
      %v2011 = vshrl.u32 %v2010, 7
      %v2012 = vsub.s32 %v2009, %v2011
      %v2013 = vrot.slane %v1999, %v2012
      %v2014 = vcombine.high %v2006, %v2006
      %v2015 = vcombine.high %v2013, %v2013
      %v2016 = vcombine.high %v1968, %v1968
      %v2018 = vunpack.c.l.s4 1983009808
      %v2019 = vunpack.c.0.s8 %v2018
      %v2020 = vlaneseq
      %v2021 = vshrl.u32 %v2020, 7
      %v2022 = vsub.s32 %v2019, %v2021
      %v2023 = vrot.slane %v1968, %v2022
      %v2025 = vunpack.c.l.s4 1983009808
      %v2026 = vunpack.c.0.s8 %v2025
      %v2027 = vlaneseq
      %v2028 = vshrl.u32 %v2027, 7
      %v2029 = vsub.s32 %v2026, %v2028
      %v2030 = vrot.slane %v2016, %v2029
      %v2031 = vcombine.high %v2023, %v2023
      %v2032 = vcombine.high %v2030, %v2030
      %v2033 = vcombine.high %v1969, %v1969
      %v2035 = vunpack.c.l.s4 1983009808
      %v2036 = vunpack.c.0.s8 %v2035
      %v2037 = vlaneseq
      %v2038 = vshrl.u32 %v2037, 7
      %v2039 = vsub.s32 %v2036, %v2038
      %v2040 = vrot.slane %v1969, %v2039
      %v2042 = vunpack.c.l.s4 1983009808
      %v2043 = vunpack.c.0.s8 %v2042
      %v2044 = vlaneseq
      %v2045 = vshrl.u32 %v2044, 7
      %v2046 = vsub.s32 %v2043, %v2045
      %v2047 = vrot.slane %v2033, %v2046
      %v2048 = vcombine.high %v2040, %v2040
      %v2049 = vcombine.high %v2047, %v2047
      %v2050 = vcombine.high %v1970, %v1970
      %v2052 = vunpack.c.l.s4 1983009808
      %v2053 = vunpack.c.0.s8 %v2052
      %v2054 = vlaneseq
      %v2055 = vshrl.u32 %v2054, 7
      %v2056 = vsub.s32 %v2053, %v2055
      %v2057 = vrot.slane %v1970, %v2056
      %v2059 = vunpack.c.l.s4 1983009808
      %v2060 = vunpack.c.0.s8 %v2059
      %v2061 = vlaneseq
      %v2062 = vshrl.u32 %v2061, 7
      %v2063 = vsub.s32 %v2060, %v2062
      %v2064 = vrot.slane %v2050, %v2063
      %v2065 = vcombine.high %v2057, %v2057
      %v2066 = vcombine.high %v2064, %v2064
      %v2067 = vcombine.high %v1971, %v1971
      %v2069 = vunpack.c.l.s4 1983009808
      %v2070 = vunpack.c.0.s8 %v2069
      %v2071 = vlaneseq
      %v2072 = vshrl.u32 %v2071, 7
      %v2073 = vsub.s32 %v2070, %v2072
      %v2074 = vrot.slane %v1971, %v2073
      %v2076 = vunpack.c.l.s4 1983009808
      %v2077 = vunpack.c.0.s8 %v2076
      %v2078 = vlaneseq
      %v2079 = vshrl.u32 %v2078, 7
      %v2080 = vsub.s32 %v2077, %v2079
      %v2081 = vrot.slane %v2067, %v2080
      %v2082 = vcombine.high %v2074, %v2074
      %v2083 = vcombine.high %v2081, %v2081
      %v2084 = vcombine.high %v1972, %v1972
      %v2086 = vunpack.c.l.s4 1983009808
      %v2087 = vunpack.c.0.s8 %v2086
      %v2088 = vlaneseq
      %v2089 = vshrl.u32 %v2088, 7
      %v2090 = vsub.s32 %v2087, %v2089
      %v2091 = vrot.slane %v1972, %v2090
      %v2093 = vunpack.c.l.s4 1983009808
      %v2094 = vunpack.c.0.s8 %v2093
      %v2095 = vlaneseq
      %v2096 = vshrl.u32 %v2095, 7
      %v2097 = vsub.s32 %v2094, %v2096
      %v2098 = vrot.slane %v2084, %v2097
      %v2099 = vcombine.high %v2091, %v2091
      %v2100 = vcombine.high %v2098, %v2098
      %v2101 = vcombine.high %v1973, %v1973
      %v2103 = vunpack.c.l.s4 1983009808
      %v2104 = vunpack.c.0.s8 %v2103
      %v2105 = vlaneseq
      %v2106 = vshrl.u32 %v2105, 7
      %v2107 = vsub.s32 %v2104, %v2106
      %v2108 = vrot.slane %v1973, %v2107
      %v2110 = vunpack.c.l.s4 1983009808
      %v2111 = vunpack.c.0.s8 %v2110
      %v2112 = vlaneseq
      %v2113 = vshrl.u32 %v2112, 7
      %v2114 = vsub.s32 %v2111, %v2113
      %v2115 = vrot.slane %v2101, %v2114
      %v2116 = vcombine.high %v2108, %v2108
      %v2117 = vcombine.high %v2115, %v2115
      %v2150 = vrot.slane %v1989, 7
      %v2151 = vrot.slane %v2150, 2
      %v2152 = vrot.slane %v1997, 7
      %v2153 = vrot.slane %v2152, 2
      %v2154 = vrot.slane %v1996, 7
      %v2155 = vrot.slane %v2154, 2
      %v2156 = vrot.slane %v1998, 7
      %v2157 = vrot.slane %v2156, 2
      %v2158 = vrot.slane %v2006, 7
      %v2159 = vrot.slane %v2158, 2
      %v2160 = vrot.slane %v2014, 7
      %v2161 = vrot.slane %v2160, 2
      %v2162 = vrot.slane %v2013, 7
      %v2163 = vrot.slane %v2162, 2
      %v2164 = vrot.slane %v2015, 7
      %v2165 = vrot.slane %v2164, 2
      %v2166 = vrot.slane %v2023, 7
      %v2167 = vrot.slane %v2166, 2
      %v2168 = vrot.slane %v2031, 7
      %v2169 = vrot.slane %v2168, 2
      %v2170 = vrot.slane %v2030, 7
      %v2171 = vrot.slane %v2170, 2
      %v2172 = vrot.slane %v2032, 7
      %v2173 = vrot.slane %v2172, 2
      %v2174 = vrot.slane %v2040, 7
      %v2175 = vrot.slane %v2174, 2
      %v2176 = vrot.slane %v2048, 7
      %v2177 = vrot.slane %v2176, 2
      %v2178 = vrot.slane %v2047, 7
      %v2179 = vrot.slane %v2178, 2
      %v2180 = vrot.slane %v2049, 7
      %v2181 = vrot.slane %v2180, 2
      %v2182 = vrot.slane %v2057, 7
      %v2183 = vrot.slane %v2182, 2
      %v2184 = vrot.slane %v2065, 7
      %v2185 = vrot.slane %v2184, 2
      %v2186 = vrot.slane %v2064, 7
      %v2187 = vrot.slane %v2186, 2
      %v2188 = vrot.slane %v2066, 7
      %v2189 = vrot.slane %v2188, 2
      %v2190 = vrot.slane %v2074, 7
      %v2191 = vrot.slane %v2190, 2
      %v2192 = vrot.slane %v2082, 7
      %v2193 = vrot.slane %v2192, 2
      %v2194 = vrot.slane %v2081, 7
      %v2195 = vrot.slane %v2194, 2
      %v2196 = vrot.slane %v2083, 7
      %v2197 = vrot.slane %v2196, 2
      %v2198 = vrot.slane %v2091, 7
      %v2199 = vrot.slane %v2198, 2
      %v2200 = vrot.slane %v2099, 7
      %v2201 = vrot.slane %v2200, 2
      %v2202 = vrot.slane %v2098, 7
      %v2203 = vrot.slane %v2202, 2
      %v2204 = vrot.slane %v2100, 7
      %v2205 = vrot.slane %v2204, 2
      %v2206 = vrot.slane %v2108, 7
      %v2207 = vrot.slane %v2206, 2
      %v2208 = vrot.slane %v2116, 7
      %v2209 = vrot.slane %v2208, 2
      %v2210 = vrot.slane %v2115, 7
      %v2211 = vrot.slane %v2210, 2
      %v2212 = vrot.slane %v2117, 7
      %v2213 = vrot.slane %v2212, 2
      %v2246 = vmax.f32 %v1989, %v2151
      %v2247 = vmax.f32 %v1997, %v2153
      %v2248 = vmax.f32 %v1996, %v2155
      %v2249 = vmax.f32 %v1998, %v2157
      %v2250 = vmax.f32 %v2006, %v2159
      %v2251 = vmax.f32 %v2014, %v2161
      %v2252 = vmax.f32 %v2013, %v2163
      %v2253 = vmax.f32 %v2015, %v2165
      %v2254 = vmax.f32 %v2023, %v2167
      %v2255 = vmax.f32 %v2031, %v2169
      %v2256 = vmax.f32 %v2030, %v2171
      %v2257 = vmax.f32 %v2032, %v2173
      %v2258 = vmax.f32 %v2040, %v2175
      %v2259 = vmax.f32 %v2048, %v2177
      %v2260 = vmax.f32 %v2047, %v2179
      %v2261 = vmax.f32 %v2049, %v2181
      %v2262 = vmax.f32 %v2057, %v2183
      %v2263 = vmax.f32 %v2065, %v2185
      %v2264 = vmax.f32 %v2064, %v2187
      %v2265 = vmax.f32 %v2066, %v2189
      %v2266 = vmax.f32 %v2074, %v2191
      %v2267 = vmax.f32 %v2082, %v2193
      %v2268 = vmax.f32 %v2081, %v2195
      %v2269 = vmax.f32 %v2083, %v2197
      %v2270 = vmax.f32 %v2091, %v2199
      %v2271 = vmax.f32 %v2099, %v2201
      %v2272 = vmax.f32 %v2098, %v2203
      %v2273 = vmax.f32 %v2100, %v2205
      %v2274 = vmax.f32 %v2108, %v2207
      %v2275 = vmax.f32 %v2116, %v2209
      %v2276 = vmax.f32 %v2115, %v2211
      %v2277 = vmax.f32 %v2117, %v2213
      %v2278 = vmax.f32 %v2246, %v2250
      %v2279 = vmax.f32 %v2247, %v2251
      %v2280 = vmax.f32 %v2248, %v2252
      %v2281 = vmax.f32 %v2249, %v2253
      %v2282 = vmax.f32 %v2254, %v2258
      %v2283 = vmax.f32 %v2255, %v2259
      %v2284 = vmax.f32 %v2256, %v2260
      %v2285 = vmax.f32 %v2257, %v2261
      %v2286 = vmax.f32 %v2262, %v2266
      %v2287 = vmax.f32 %v2263, %v2267
      %v2288 = vmax.f32 %v2264, %v2268
      %v2289 = vmax.f32 %v2265, %v2269
      %v2290 = vmax.f32 %v2270, %v2274
      %v2291 = vmax.f32 %v2271, %v2275
      %v2292 = vmax.f32 %v2272, %v2276
      %v2293 = vmax.f32 %v2273, %v2277
      %v2298 = vlaneseq
      %v2299 = vshrl.u32 %v2298, 7
      %v2300 = vsub.s32 0, %v2299
      %v2301 = vrot.slane %v2278, %v2300
      %v2302 = vlaneseq
      %v2303 = vshrl.u32 %v2302, 7
      %v2304 = vsub.s32 0, %v2303
      %v2305 = vrot.slane %v2282, %v2304
      %v2306 = vlaneseq
      %v2307 = vshrl.u32 %v2306, 7
      %v2308 = vsub.s32 0, %v2307
      %v2309 = vrot.slane %v2286, %v2308
      %v2310 = vlaneseq
      %v2311 = vshrl.u32 %v2310, 7
      %v2312 = vsub.s32 0, %v2311
      %v2313 = vrot.slane %v2290, %v2312
      %vm2314 = vcmask 1041409
      %v2315 = vsel %vm2314, %v2305, %v2301
      %vm2316 = vcmask 1042434
      %v2317 = vsel %vm2316, %v2309, %v2315
      %vm2318 = vcmask 1043459
      %v2319 = vsel %vm2318, %v2313, %v2317
      %v2325 = vlaneseq
      %v2326 = vshrl.u32 %v2325, 7
      %v2327 = vsub.s32 0, %v2326
      %v2328 = vrot.slane %v2279, %v2327
      %v2329 = vlaneseq
      %v2330 = vshrl.u32 %v2329, 7
      %v2331 = vsub.s32 0, %v2330
      %v2332 = vrot.slane %v2283, %v2331
      %v2333 = vlaneseq
      %v2334 = vshrl.u32 %v2333, 7
      %v2335 = vsub.s32 0, %v2334
      %v2336 = vrot.slane %v2287, %v2335
      %v2337 = vlaneseq
      %v2338 = vshrl.u32 %v2337, 7
      %v2339 = vsub.s32 0, %v2338
      %v2340 = vrot.slane %v2291, %v2339
      %v2341 = vsel %vm2314, %v2332, %v2328
      %v2342 = vsel %vm2316, %v2336, %v2341
      %v2343 = vsel %vm2318, %v2340, %v2342
      %2344 = vrot.lane.b32.xlu0 %v2343, 32
      %v2345 = vpop.permute.xlu0 %2344
      %v2351 = vlaneseq
      %v2352 = vshrl.u32 %v2351, 7
      %v2353 = vsub.s32 0, %v2352
      %v2354 = vrot.slane %v2280, %v2353
      %v2355 = vlaneseq
      %v2356 = vshrl.u32 %v2355, 7
      %v2357 = vsub.s32 0, %v2356
      %v2358 = vrot.slane %v2284, %v2357
      %v2359 = vlaneseq
      %v2360 = vshrl.u32 %v2359, 7
      %v2361 = vsub.s32 0, %v2360
      %v2362 = vrot.slane %v2288, %v2361
      %v2363 = vlaneseq
      %v2364 = vshrl.u32 %v2363, 7
      %v2365 = vsub.s32 0, %v2364
      %v2366 = vrot.slane %v2292, %v2365
      %v2367 = vsel %vm2314, %v2358, %v2354
      %v2368 = vsel %vm2316, %v2362, %v2367
      %v2369 = vsel %vm2318, %v2366, %v2368
      %2370 = vrot.lane.b32.xlu0 %v2369, 64
      %v2371 = vpop.permute.xlu0 %2370
      %v2377 = vlaneseq
      %v2378 = vshrl.u32 %v2377, 7
      %v2379 = vsub.s32 0, %v2378
      %v2380 = vrot.slane %v2281, %v2379
      %v2381 = vlaneseq
      %v2382 = vshrl.u32 %v2381, 7
      %v2383 = vsub.s32 0, %v2382
      %v2384 = vrot.slane %v2285, %v2383
      %v2385 = vlaneseq
      %v2386 = vshrl.u32 %v2385, 7
      %v2387 = vsub.s32 0, %v2386
      %v2388 = vrot.slane %v2289, %v2387
      %v2389 = vlaneseq
      %v2390 = vshrl.u32 %v2389, 7
      %v2391 = vsub.s32 0, %v2390
      %v2392 = vrot.slane %v2293, %v2391
      %v2393 = vsel %vm2314, %v2384, %v2380
      %v2394 = vsel %vm2316, %v2388, %v2393
      %v2395 = vsel %vm2318, %v2392, %v2394
      %2396 = vrot.lane.b32.xlu0 %v2395, 96
      %v2397 = vpop.permute.xlu0 %2396
      %v2399 = vsel %vm1865, %v2319, %v2345
      %v2400 = vsel %vm1720, %v2399, %v2371
      %vm2401 = vcmask 785408
      %v2402 = vsel %vm2401, %v2400, %v2397
      %2403 = vst [vmem:[%s168] sm:$0xf] %v2402
      %p2404 = scmp.lt.s32.totalorder %s14, 1
      %s2405 = scalar_select %p2404, %s14, 1
      %s2406 = smul.addr %s2405, 4
      %s2407 = scalar_lea.vmem %s3, %s2406
      // Predicated region
      $region33: #{vgg_block_3d.1} parent=31 // pred_check
        %p2408 = pneg %p100
      $region34: #{vgg_block_3d.1} parent=31 // pred_check_branch
        %2410 = sbr.rel (%p2408) target = $region36
      $region35: #{vgg_block_3d.1} parent=31 // pred_region
        _
      $region36: #{vgg_block_3d.1} parent=31 // pred_fallthru
        _
    $region32: #{vgg_block_3d.1} parent=5 // pred_fallthru
      _
    %p2411 = scmp.le.s32.totalorder 2, %s9
    // Predicated region
    $region37: #{vgg_block_3d.1} parent=5 // pred_check
      %p2412 = pneg %p2411
    $region38: #{vgg_block_3d.1} parent=5 // pred_check_branch
      %2414 = sbr.rel (%p2412) target = $region40
    $region39: #{vgg_block_3d.1} parent=5 // pred_region
      %s2415 = ssub.s32 %s9, 2
      // Predicated region
      $region41: #{vgg_block_3d.1} parent=39 // pred_check
        %p2416 = pneg %p106
      $region42: #{vgg_block_3d.1} parent=39 // pred_check_branch
        %2418 = sbr.rel (%p2416) target = $region44
      $region43: #{vgg_block_3d.1} parent=39 // pred_region
        %p2419 = scmp.lt.s32.totalorder %s15, 1
        %s2420 = scalar_select %p2419, %s15, 1
        %s2421 = smul.addr %s2420, 4
        %s2422 = scalar_lea.vmem %s3, %s2421
      $region44: #{vgg_block_3d.1} parent=39 // pred_fallthru
        _
    $region40: #{vgg_block_3d.1} parent=5 // pred_fallthru
      _
  $region6: #{vgg_block_3d.1} parent=0 // loop_footer
    %s13 = sadd.s32 1, %s9
  $region7: #{vgg_block_3d.1} parent=0 // loop_footer_branch
    %8 = sbr.rel target = $region3
  $region8: #{vgg_block_3d.1} parent=0 // loop_exit
    _

</llo_original>
